<compile_context>
chip_gen: v6e
topology: v6e:2x2x1
jax: 0.10.0
libtpu: 0.0.40
codegen_flags: <defaults>
</compile_context>

<pallas_src>
import functools

import jax
import jax.numpy as jnp
from jax.experimental import pallas as pl
from jax.experimental.pallas import tpu as pltpu


# --------------------------------------------------------------------------
# block-size helpers
# --------------------------------------------------------------------------
def _round_up(x, m):
    return ((x + m - 1) // m) * m


def _pick_row_block(m, cap=512):
    """Row tile for the batched input projection.

    cap=512 is a multiple of 256 so big tiles feed the v6e/v7x 256x256 MXUs;
    small m just rounds up to a sublane multiple (single block).  The caller
    pads the row count up to a multiple of the tile, so there is no
    "one huge block" fallback anymore.
    """
    if m <= cap:
        return _round_up(m, 8)
    return cap


def _pick_time_block(s, b, cap=64):
    """Timesteps processed per grid step of the recurrence kernel.

    Blocks of (t_blk * b) gate rows must be 8-row aligned unless a single
    block covers the whole sequence.  cap=64 amortizes the ~0.35us per-grid-step
    overhead for long sequences.
    """
    if s <= cap:
        return s
    for t in range(cap, 0, -1):
        if s % t == 0 and (t * b) % 8 == 0:
            return t
    if b % 8 == 0:
        return 1
    # TODO(synk): handle ragged S with small, non-8-aligned batch via a masked
    #             last block instead of one monolithic block.
    return s


# --------------------------------------------------------------------------
# Kernel 1: gates_x = x_flat @ W_ih^T + (b_ih + b_hh)   (one big MXU matmul)
# --------------------------------------------------------------------------
def input_proj_kernel(x_ref, w_ref, b_ref, gx_ref):
    gx_ref[...] = (
        jnp.dot(x_ref[...], w_ref[...], preferred_element_type=jnp.float32)
        + b_ref[...]
    ).astype(gx_ref.dtype)


def input_projection(x_flat, w_ih_t, b, out_dtype):
    M, E = x_flat.shape
    G = w_ih_t.shape[1]                       # 4H
    tm = _pick_row_block(M)
    M_pad = _round_up(M, tm)
    if M_pad != M:
        x_flat = jnp.pad(x_flat, ((0, M_pad - M), (0, 0)))

    out = pl.pallas_call(
        input_proj_kernel,
        out_shape=jax.ShapeDtypeStruct((M_pad, G), out_dtype),
        grid_spec=pltpu.PrefetchScalarGridSpec(
            num_scalar_prefetch=0,
            grid=(M_pad // tm,),
            in_specs=[
                pl.BlockSpec((tm, E), lambda i: (i, 0)),
                pl.BlockSpec((E, G), lambda i: (0, 0)),
                pl.BlockSpec((1, G), lambda i: (0, 0)),
            ],
            out_specs=pl.BlockSpec((tm, G), lambda i: (i, 0)),
        ),
        compiler_params=pltpu.CompilerParams(
            dimension_semantics=("parallel",)),
    )(x_flat, w_ih_t, b)
    return out[:M] if M_pad != M else out


# --------------------------------------------------------------------------
# Kernel 2: LSTM recurrence (h @ W_hh^T + gates_x[t]) + fused final Linear.
# Gate layout inside the kernel is (i, f, o, g): sigmoid on [0:3H], tanh on [3H:4H].
# --------------------------------------------------------------------------
def lstm_rec_kernel(gx_ref, whh_ref, wfc_ref, bfc_ref, out_ref,
                    h_sc, c_sc, *extra, t_blk, batch, hidden, cast_gates):
    blk = pl.program_id(0)
    n_blk = pl.num_programs(0)
    B, H = batch, hidden

    @pl.when(blk == 0)
    def _():
        h_sc[...] = jnp.zeros_like(h_sc)
        c_sc[...] = jnp.zeros_like(c_sc)

    if cast_gates:
        # One vectorized upcast per grid step; all per-timestep slicing then
        # happens on 32-bit VMEM data (off the serial critical path).
        gxf_sc = extra[0]
        gxf_sc[...] = gx_ref[...].astype(jnp.float32)
        gsrc = gxf_sc
    else:
        gsrc = gx_ref

    whh = whh_ref[...]                         # hoist recurrent weight load

    def step(t, carry):
        h, c = carry
        row = pl.multiple_of(t * B, B)
        # gates_x already contains x_t @ W_ih^T + (b_ih + b_hh)
        gates = gsrc[pl.ds(row, B), :].astype(jnp.float32) + jnp.dot(
            h.astype(whh.dtype), whh, preferred_element_type=jnp.float32)
        # (i, f, o, g) column order: one sigmoid over 3H lanes, one tanh over H.
        sig = jax.nn.sigmoid(gates[:, :3 * H])
        g_g = jnp.tanh(gates[:, 3 * H:])
        i_g = sig[:, 0 * H:1 * H]
        f_g = sig[:, 1 * H:2 * H]
        o_g = sig[:, 2 * H:3 * H]
        c = f_g * c + i_g * g_g
        h = o_g * jnp.tanh(c)
        return h, c

    h, c = jax.lax.fori_loop(0, t_blk, step, (h_sc[...], c_sc[...]),
                             unroll=min(8, t_blk))
    h_sc[...] = h
    c_sc[...] = c

    @pl.when(blk == n_blk - 1)
    def _():
        wfc = wfc_ref[...]
        out_ref[...] = (
            jnp.dot(h.astype(wfc.dtype), wfc,
                    preferred_element_type=jnp.float32)
            + bfc_ref[...]
        ).astype(out_ref.dtype)


def lstm_recurrence_fc(gates_flat, w_hh_t, w_fc_t, b_fc, batch):
    M, G = gates_flat.shape
    B = batch
    S = M // B
    H = w_hh_t.shape[0]
    O = w_fc_t.shape[1]
    t_blk = _pick_time_block(S, B)
    rows_blk = t_blk * B
    cast_gates = gates_flat.dtype != jnp.float32

    scratch = [
        pltpu.VMEM((B, H), jnp.float32),       # h state (f32 carry)
        pltpu.VMEM((B, H), jnp.float32),       # c state (f32 carry)
    ]
    if cast_gates:
        scratch.append(pltpu.VMEM((rows_blk, G), jnp.float32))  # upcast gates block

    kernel = functools.partial(
        lstm_rec_kernel, t_blk=t_blk, batch=B, hidden=H, cast_gates=cast_gates)

    return pl.pallas_call(
        kernel,
        out_shape=jax.ShapeDtypeStruct((B, O), jnp.float32),
        grid_spec=pltpu.PrefetchScalarGridSpec(
            num_scalar_prefetch=0,
            grid=(S // t_blk,),
            in_specs=[
                pl.BlockSpec((rows_blk, G), lambda i: (i, 0)),  # dense 2D gates block
                pl.BlockSpec((H, G), lambda i: (0, 0)),         # W_hh^T
                pl.BlockSpec((H, O), lambda i: (0, 0)),         # W_fc^T
                pl.BlockSpec((1, O), lambda i: (0, 0)),         # b_fc
            ],
            out_specs=pl.BlockSpec((B, O), lambda i: (0, 0)),
            scratch_shapes=scratch,
        ),
        compiler_params=pltpu.CompilerParams(
            dimension_semantics=("arbitrary",)),   # serial carry over time blocks
    )(gates_flat, w_hh_t, w_fc_t, b_fc)


# --------------------------------------------------------------------------
# Full forward
# --------------------------------------------------------------------------
def text_classifier_forward(text, params, compute_dtype=jnp.float32):
    """text: (B, S) int32 token ids; params must be gate-reordered (prepare_params).

    Returns (B, output_dim) f32 logits.
    """
    embed_table = params["embedding"]
    w_ih_t = params["w_ih_t"].astype(compute_dtype)     # (E, 4H)  (i,f,o,g) cols
    w_hh_t = params["w_hh_t"].astype(compute_dtype)     # (H, 4H)  (i,f,o,g) cols
    b = params["b"]                                      # (1, 4H) = b_ih + b_hh, f32
    w_fc_t = params["w_fc_t"].astype(compute_dtype)     # (H, O)
    b_fc = params["b_fc"]                                # (1, O)

    B, S = text.shape

    # Embedding gather directly in flattened seq-major order (no (B,S,E)
    # materialize + transpose of the activation tensor).
    ids = text.T.reshape(-1)                                           # (S*B,)
    x_flat = jnp.take(embed_table, ids, axis=0).astype(compute_dtype)  # (S*B, E)

    # Phase 1: hoisted input projection, one big matmul over all timesteps.
    gates_flat = input_projection(x_flat, w_ih_t, b, out_dtype=compute_dtype)  # (S*B, 4H)

    # Phase 2: recurrence + fused final Linear (gates stay dense 2D, no reshape).
    return lstm_recurrence_fc(gates_flat, w_hh_t, w_fc_t, b_fc, batch=B)


def prepare_params(params):
    """Offline column permutation of the LSTM weights/bias from PyTorch gate
    order (i, f, g, o) to kernel order (i, f, o, g) so sigmoid/tanh each run
    over one contiguous slice inside the recurrence kernel."""
    H = params["w_hh_t"].shape[0]
    perm = jnp.concatenate([jnp.arange(0, 2 * H),
                            jnp.arange(3 * H, 4 * H),
                            jnp.arange(2 * H, 3 * H)])
    p = dict(params)
    p["w_ih_t"] = params["w_ih_t"][:, perm]
    p["w_hh_t"] = params["w_hh_t"][:, perm]
    p["b"] = params["b"][:, perm]
    return p


# --------------------------------------------------------------------------
# Pure-JAX reference (reproduces the PyTorch forward, PyTorch gate order)
# --------------------------------------------------------------------------
def reference_forward(text, params):
    embed_table = params["embedding"]
    w_ih_t, w_hh_t, b = params["w_ih_t"], params["w_hh_t"], params["b"]
    w_fc_t, b_fc = params["w_fc_t"], params["b_fc"]
    H = w_hh_t.shape[0]

    embedded = jnp.take(embed_table, text, axis=0)  # (B, S, E)
    B = embedded.shape[0]

    def step(carry, x_t):
        h, c = carry
        gates = x_t @ w_ih_t + h @ w_hh_t + b
        i = jax.nn.sigmoid(gates[:, 0 * H:1 * H])
        f = jax.nn.sigmoid(gates[:, 1 * H:2 * H])
        g = jnp.tanh(gates[:, 2 * H:3 * H])
        o = jax.nn.sigmoid(gates[:, 3 * H:4 * H])
        c = f * c + i * g
        h = o * jnp.tanh(c)
        return (h, c), None

    h0 = jnp.zeros((B, H), jnp.float32)
    c0 = jnp.zeros((B, H), jnp.float32)
    (h_final, _), _ = jax.lax.scan(step, (h0, c0),
                                   jnp.transpose(embedded, (1, 0, 2)))
    return h_final @ w_fc_t + b_fc


def make_params(key, vocab_size, embed_dim, hidden_dim, output_dim):
    ks = jax.random.split(key, 7)
    scale = 0.1
    return {
        "embedding": scale * jax.random.normal(ks[0], (vocab_size, embed_dim), jnp.float32),
        # PyTorch LSTM weights are (4H, E)/(4H, H); store pre-transposed (PyTorch gate order).
        "w_ih_t": scale * jax.random.normal(ks[1], (embed_dim, 4 * hidden_dim), jnp.float32),
        "w_hh_t": scale * jax.random.normal(ks[2], (hidden_dim, 4 * hidden_dim), jnp.float32),
        # b = b_ih + b_hh folded together
        "b": (scale * jax.random.normal(ks[3], (1, 4 * hidden_dim), jnp.float32)
              + scale * jax.random.normal(ks[4], (1, 4 * hidden_dim), jnp.float32)),
        "w_fc_t": scale * jax.random.normal(ks[5], (hidden_dim, output_dim), jnp.float32),
        "b_fc": scale * jax.random.normal(ks[6], (1, output_dim), jnp.float32),
    }


if __name__ == "__main__":
    vocab_size, embed_dim, hidden_dim, output_dim = 50, 16, 32, 4
    batch, seq = 2, 8

    key = jax.random.PRNGKey(0)
    k_text, k_params = jax.random.split(key)
    text = jax.random.randint(k_text, (batch, seq), 0, vocab_size, dtype=jnp.int32)
    params = make_params(k_params, vocab_size, embed_dim, hidden_dim, output_dim)
    kparams = prepare_params(params)            # offline gate reorder (i,f,g,o)->(i,f,o,g)

    forward = jax.jit(text_classifier_forward, static_argnames=("compute_dtype",))

    ref = jax.block_until_ready(reference_forward(text, params))

    # f32 path: tight correctness check.
    out = jax.block_until_ready(forward(text, kparams, compute_dtype=jnp.float32))
    assert out.shape == (batch, output_dim)
    assert jnp.allclose(out, ref, atol=1e-4, rtol=1e-4), (out, ref)

    # bf16 path: halves the gates_x HBM round trip (f32 accumulation, f32 h/c carry);
    # looser tolerance since weights/activations/gates are bf16.
    out_bf16 = jax.block_until_ready(forward(text, kparams, compute_dtype=jnp.bfloat16))
    assert out_bf16.shape == (batch, output_dim)
    assert jnp.allclose(out_bf16, ref, atol=5e-2, rtol=5e-2), (out_bf16, ref)

    print("KERNEL_OK")
</pallas_src>

<mosaic_0001>
module attributes {stable_mosaic.version = 11 : i64} {
  func.func @input_proj_kernel(%arg0: i32, %arg1: memref<16x16xf32, #tpu.memory_space<vmem>>, %arg2: memref<16x128xf32, #tpu.memory_space<vmem>>, %arg3: memref<1x128xf32, #tpu.memory_space<vmem>>, %arg4: memref<16x128xf32, #tpu.memory_space<vmem>>) attributes {dimension_semantics = [#tpu.dimension_semantics<parallel>], iteration_bounds = array<i64: 1>, scalar_prefetch = 0 : i64, scratch_operands = 0 : i64, tpu.core_type = #tpu.core_type<tc>, window_params = [{transform_indices = @transform_0, window_bounds = array<i64: 16, 16>}, {pipeline_mode = #tpu.pipeline_mode<synchronous>, transform_indices = @transform_1, window_bounds = array<i64: 16, 128>}, {pipeline_mode = #tpu.pipeline_mode<synchronous>, transform_indices = @transform_2, window_bounds = array<i64: 1, 128>}, {transform_indices = @transform_3, window_bounds = array<i64: 16, 128>}]} {
    %c0 = arith.constant 0 : index
    %c0_0 = arith.constant 0 : index
    %0 = vector.load %arg1[%c0, %c0_0] : memref<16x16xf32, #tpu.memory_space<vmem>>, vector<16x16xf32>
    %c0_1 = arith.constant 0 : index
    %c0_2 = arith.constant 0 : index
    %1 = vector.load %arg2[%c0_1, %c0_2] : memref<16x128xf32, #tpu.memory_space<vmem>>, vector<16x128xf32>
    %cst = arith.constant dense<0.000000e+00> : vector<16x128xf32>
    %2 = tpu.matmul %0, %1, %cst {dimension_numbers = #tpu.dot_dimension_numbers<[1], [0], [0], [1], [0, 0, 1, 1], [], []>} : vector<16x16xf32>, vector<16x128xf32>, vector<16x128xf32> -> vector<16x128xf32>
    %c0_3 = arith.constant 0 : index
    %c0_4 = arith.constant 0 : index
    %3 = vector.load %arg3[%c0_3, %c0_4] : memref<1x128xf32, #tpu.memory_space<vmem>>, vector<1x128xf32>
    %4 = vector.broadcast %3 : vector<1x128xf32> to vector<16x128xf32>
    %5 = arith.addf %2, %4 : vector<16x128xf32>
    %c0_5 = arith.constant 0 : index
    %c0_6 = arith.constant 0 : index
    %6 = vector.load %arg4[%c0_5, %c0_6] : memref<16x128xf32, #tpu.memory_space<vmem>>, vector<16x128xf32>
    tpu.vector_store %arg4[%c0_5, %c0_6], %5 {strides = array<i32>} : memref<16x128xf32, #tpu.memory_space<vmem>>, vector<16x128xf32>,
    return
  }
  func.func @transform_0(%arg0: i32) -> (i32, i32) {
    %c0_i32 = arith.constant 0 : i32
    %c0_i32_0 = arith.constant 0 : i32
    return %arg0, %c0_i32 : i32, i32
  }
  func.func @transform_1(%arg0: i32) -> (i32, i32) {
    %c0_i32 = arith.constant 0 : i32
    %c0_i32_0 = arith.constant 0 : i32
    %c0_i32_1 = arith.constant 0 : i32
    return %c0_i32, %c0_i32_0 : i32, i32
  }
  func.func @transform_2(%arg0: i32) -> (i32, i32) {
    %c0_i32 = arith.constant 0 : i32
    %c0_i32_0 = arith.constant 0 : i32
    %c0_i32_1 = arith.constant 0 : i32
    return %c0_i32, %c0_i32_0 : i32, i32
  }
  func.func @transform_3(%arg0: i32) -> (i32, i32) {
    %c0_i32 = arith.constant 0 : i32
    %c0_i32_0 = arith.constant 0 : i32
    return %arg0, %c0_i32 : i32, i32
  }
}

module attributes {stable_mosaic.version = 11 : i64} {
  func.func @lstm_rec_kernel(%arg0: i32, %arg1: memref<16x128xf32, #tpu.memory_space<vmem>>, %arg2: memref<32x128xf32, #tpu.memory_space<vmem>>, %arg3: memref<32x4xf32, #tpu.memory_space<vmem>>, %arg4: memref<1x4xf32, #tpu.memory_space<vmem>>, %arg5: memref<2x4xf32, #tpu.memory_space<vmem>>, %arg6: memref<2x32xf32, #tpu.memory_space<vmem>>, %arg7: memref<2x32xf32, #tpu.memory_space<vmem>>) attributes {dimension_semantics = [#tpu.dimension_semantics<arbitrary>], iteration_bounds = array<i64: 1>, scalar_prefetch = 0 : i64, scratch_operands = 2 : i64, tpu.core_type = #tpu.core_type<tc>, window_params = [{transform_indices = @transform_0, window_bounds = array<i64: 16, 128>}, {pipeline_mode = #tpu.pipeline_mode<synchronous>, transform_indices = @transform_1, window_bounds = array<i64: 32, 128>}, {pipeline_mode = #tpu.pipeline_mode<synchronous>, transform_indices = @transform_2, window_bounds = array<i64: 32, 4>}, {pipeline_mode = #tpu.pipeline_mode<synchronous>, transform_indices = @transform_3, window_bounds = array<i64: 1, 4>}, {pipeline_mode = #tpu.pipeline_mode<synchronous>, transform_indices = @transform_4, window_bounds = array<i64: 2, 4>}]} {
    %c0_i32 = arith.constant 0 : i32
    %0 = arith.cmpi eq, %arg0, %c0_i32 : i32
    %1 = arith.extui %0 : i1 to i32
    %c0_i32_0 = arith.constant 0 : i32
    %2 = arith.cmpi ne, %1, %c0_i32_0 : i32
    scf.if %2 {
      %cst_44 = arith.constant 0.000000e+00 : f32
      %187 = vector.broadcast %cst_44 : f32 to vector<2x32xf32>
      %c0_45 = arith.constant 0 : index
      %c0_46 = arith.constant 0 : index
      %188 = vector.load %arg6[%c0_45, %c0_46] : memref<2x32xf32, #tpu.memory_space<vmem>>, vector<2x32xf32>
      tpu.vector_store %arg6[%c0_45, %c0_46], %187 {strides = array<i32>} : memref<2x32xf32, #tpu.memory_space<vmem>>, vector<2x32xf32>,
      %cst_47 = arith.constant 0.000000e+00 : f32
      %189 = vector.broadcast %cst_47 : f32 to vector<2x32xf32>
      %c0_48 = arith.constant 0 : index
      %c0_49 = arith.constant 0 : index
      %190 = vector.load %arg7[%c0_48, %c0_49] : memref<2x32xf32, #tpu.memory_space<vmem>>, vector<2x32xf32>
      tpu.vector_store %arg7[%c0_48, %c0_49], %189 {strides = array<i32>} : memref<2x32xf32, #tpu.memory_space<vmem>>, vector<2x32xf32>,
    } else {
    }
    %c0 = arith.constant 0 : index
    %c0_1 = arith.constant 0 : index
    %3 = vector.load %arg2[%c0, %c0_1] : memref<32x128xf32, #tpu.memory_space<vmem>>, vector<32x128xf32>
    %c0_2 = arith.constant 0 : index
    %c0_3 = arith.constant 0 : index
    %4 = vector.load %arg6[%c0_2, %c0_3] : memref<2x32xf32, #tpu.memory_space<vmem>>, vector<2x32xf32>
    %c0_4 = arith.constant 0 : index
    %c0_5 = arith.constant 0 : index
    %5 = vector.load %arg7[%c0_4, %c0_5] : memref<2x32xf32, #tpu.memory_space<vmem>>, vector<2x32xf32>
    %c0_i32_6 = arith.constant 0 : i32
    %c2_i32 = arith.constant 2 : i32
    %6 = arith.muli %c0_i32_6, %c2_i32 : i32
    %7 = tpu.assume_multiple %6, 2 : i32
    %8 = arith.index_cast %7 : i32 to index
    %c0_7 = arith.constant 0 : index
    %9 = vector.load %arg1[%8, %c0_7] : memref<16x128xf32, #tpu.memory_space<vmem>>, vector<2x128xf32>
    %cst = arith.constant dense<0.000000e+00> : vector<2x128xf32>
    %10 = tpu.matmul %4, %3, %cst {dimension_numbers = #tpu.dot_dimension_numbers<[1], [0], [0], [1], [0, 0, 1, 1], [], []>} : vector<2x32xf32>, vector<32x128xf32>, vector<2x128xf32> -> vector<2x128xf32>
    %11 = arith.addf %9, %10 : vector<2x128xf32>
    %12 = vector.extract_strided_slice %11 {offsets = [0, 0], sizes = [2, 96], strides = [1, 1]} : vector<2x128xf32> to vector<2x96xf32>
    %13 = arith.negf %12 : vector<2x96xf32>
    %14 = math.exp %13 : vector<2x96xf32>
    %cst_8 = arith.constant 1.000000e+00 : f32
    %15 = vector.broadcast %cst_8 : f32 to vector<2x96xf32>
    %16 = arith.addf %15, %14 : vector<2x96xf32>
    %17 = arith.divf %15, %16 : vector<2x96xf32>
    %18 = vector.extract_strided_slice %11 {offsets = [0, 96], sizes = [2, 32], strides = [1, 1]} : vector<2x128xf32> to vector<2x32xf32>
    %19 = math.tanh %18 : vector<2x32xf32>
    %20 = vector.extract_strided_slice %17 {offsets = [0, 0], sizes = [2, 32], strides = [1, 1]} : vector<2x96xf32> to vector<2x32xf32>
    %21 = vector.extract_strided_slice %17 {offsets = [0, 32], sizes = [2, 32], strides = [1, 1]} : vector<2x96xf32> to vector<2x32xf32>
    %22 = vector.extract_strided_slice %17 {offsets = [0, 64], sizes = [2, 32], strides = [1, 1]} : vector<2x96xf32> to vector<2x32xf32>
    %23 = arith.mulf %21, %5 : vector<2x32xf32>
    %24 = arith.mulf %20, %19 : vector<2x32xf32>
    %25 = arith.addf %23, %24 : vector<2x32xf32>
    %26 = math.tanh %25 : vector<2x32xf32>
    %27 = arith.mulf %22, %26 : vector<2x32xf32>
    %c1_i32 = arith.constant 1 : i32
    %c2_i32_9 = arith.constant 2 : i32
    %28 = arith.muli %c1_i32, %c2_i32_9 : i32
    %29 = tpu.assume_multiple %28, 2 : i32
    %30 = arith.index_cast %29 : i32 to index
    %c0_10 = arith.constant 0 : index
    %31 = vector.load %arg1[%30, %c0_10] : memref<16x128xf32, #tpu.memory_space<vmem>>, vector<2x128xf32>
    %cst_11 = arith.constant dense<0.000000e+00> : vector<2x128xf32>
    %32 = tpu.matmul %27, %3, %cst_11 {dimension_numbers = #tpu.dot_dimension_numbers<[1], [0], [0], [1], [0, 0, 1, 1], [], []>} : vector<2x32xf32>, vector<32x128xf32>, vector<2x128xf32> -> vector<2x128xf32>
    %33 = arith.addf %31, %32 : vector<2x128xf32>
    %34 = vector.extract_strided_slice %33 {offsets = [0, 0], sizes = [2, 96], strides = [1, 1]} : vector<2x128xf32> to vector<2x96xf32>
    %35 = arith.negf %34 : vector<2x96xf32>
    %36 = math.exp %35 : vector<2x96xf32>
    %cst_12 = arith.constant 1.000000e+00 : f32
    %37 = vector.broadcast %cst_12 : f32 to vector<2x96xf32>
    %38 = arith.addf %37, %36 : vector<2x96xf32>
    %39 = arith.divf %37, %38 : vector<2x96xf32>
    %40 = vector.extract_strided_slice %33 {offsets = [0, 96], sizes = [2, 32], strides = [1, 1]} : vector<2x128xf32> to vector<2x32xf32>
    %41 = math.tanh %40 : vector<2x32xf32>
    %42 = vector.extract_strided_slice %39 {offsets = [0, 0], sizes = [2, 32], strides = [1, 1]} : vector<2x96xf32> to vector<2x32xf32>
    %43 = vector.extract_strided_slice %39 {offsets = [0, 32], sizes = [2, 32], strides = [1, 1]} : vector<2x96xf32> to vector<2x32xf32>
    %44 = vector.extract_strided_slice %39 {offsets = [0, 64], sizes = [2, 32], strides = [1, 1]} : vector<2x96xf32> to vector<2x32xf32>
    %45 = arith.mulf %43, %25 : vector<2x32xf32>
    %46 = arith.mulf %42, %41 : vector<2x32xf32>
    %47 = arith.addf %45, %46 : vector<2x32xf32>
    %48 = math.tanh %47 : vector<2x32xf32>
    %49 = arith.mulf %44, %48 : vector<2x32xf32>
    %c2_i32_13 = arith.constant 2 : i32
    %c2_i32_14 = arith.constant 2 : i32
    %50 = arith.muli %c2_i32_13, %c2_i32_14 : i32
    %51 = tpu.assume_multiple %50, 2 : i32
    %52 = arith.index_cast %51 : i32 to index
    %c0_15 = arith.constant 0 : index
    %53 = vector.load %arg1[%52, %c0_15] : memref<16x128xf32, #tpu.memory_space<vmem>>, vector<2x128xf32>
    %cst_16 = arith.constant dense<0.000000e+00> : vector<2x128xf32>
    %54 = tpu.matmul %49, %3, %cst_16 {dimension_numbers = #tpu.dot_dimension_numbers<[1], [0], [0], [1], [0, 0, 1, 1], [], []>} : vector<2x32xf32>, vector<32x128xf32>, vector<2x128xf32> -> vector<2x128xf32>
    %55 = arith.addf %53, %54 : vector<2x128xf32>
    %56 = vector.extract_strided_slice %55 {offsets = [0, 0], sizes = [2, 96], strides = [1, 1]} : vector<2x128xf32> to vector<2x96xf32>
    %57 = arith.negf %56 : vector<2x96xf32>
    %58 = math.exp %57 : vector<2x96xf32>
    %cst_17 = arith.constant 1.000000e+00 : f32
    %59 = vector.broadcast %cst_17 : f32 to vector<2x96xf32>
    %60 = arith.addf %59, %58 : vector<2x96xf32>
    %61 = arith.divf %59, %60 : vector<2x96xf32>
    %62 = vector.extract_strided_slice %55 {offsets = [0, 96], sizes = [2, 32], strides = [1, 1]} : vector<2x128xf32> to vector<2x32xf32>
    %63 = math.tanh %62 : vector<2x32xf32>
    %64 = vector.extract_strided_slice %61 {offsets = [0, 0], sizes = [2, 32], strides = [1, 1]} : vector<2x96xf32> to vector<2x32xf32>
    %65 = vector.extract_strided_slice %61 {offsets = [0, 32], sizes = [2, 32], strides = [1, 1]} : vector<2x96xf32> to vector<2x32xf32>
    %66 = vector.extract_strided_slice %61 {offsets = [0, 64], sizes = [2, 32], strides = [1, 1]} : vector<2x96xf32> to vector<2x32xf32>
    %67 = arith.mulf %65, %47 : vector<2x32xf32>
    %68 = arith.mulf %64, %63 : vector<2x32xf32>
    %69 = arith.addf %67, %68 : vector<2x32xf32>
    %70 = math.tanh %69 : vector<2x32xf32>
    %71 = arith.mulf %66, %70 : vector<2x32xf32>
    %c3_i32 = arith.constant 3 : i32
    %c2_i32_18 = arith.constant 2 : i32
    %72 = arith.muli %c3_i32, %c2_i32_18 : i32
    %73 = tpu.assume_multiple %72, 2 : i32
    %74 = arith.index_cast %73 : i32 to index
    %c0_19 = arith.constant 0 : index
    %75 = vector.load %arg1[%74, %c0_19] : memref<16x128xf32, #tpu.memory_space<vmem>>, vector<2x128xf32>
    %cst_20 = arith.constant dense<0.000000e+00> : vector<2x128xf32>
    %76 = tpu.matmul %71, %3, %cst_20 {dimension_numbers = #tpu.dot_dimension_numbers<[1], [0], [0], [1], [0, 0, 1, 1], [], []>} : vector<2x32xf32>, vector<32x128xf32>, vector<2x128xf32> -> vector<2x128xf32>
    %77 = arith.addf %75, %76 : vector<2x128xf32>
    %78 = vector.extract_strided_slice %77 {offsets = [0, 0], sizes = [2, 96], strides = [1, 1]} : vector<2x128xf32> to vector<2x96xf32>
    %79 = arith.negf %78 : vector<2x96xf32>
    %80 = math.exp %79 : vector<2x96xf32>
    %cst_21 = arith.constant 1.000000e+00 : f32
    %81 = vector.broadcast %cst_21 : f32 to vector<2x96xf32>
    %82 = arith.addf %81, %80 : vector<2x96xf32>
    %83 = arith.divf %81, %82 : vector<2x96xf32>
    %84 = vector.extract_strided_slice %77 {offsets = [0, 96], sizes = [2, 32], strides = [1, 1]} : vector<2x128xf32> to vector<2x32xf32>
    %85 = math.tanh %84 : vector<2x32xf32>
    %86 = vector.extract_strided_slice %83 {offsets = [0, 0], sizes = [2, 32], strides = [1, 1]} : vector<2x96xf32> to vector<2x32xf32>
    %87 = vector.extract_strided_slice %83 {offsets = [0, 32], sizes = [2, 32], strides = [1, 1]} : vector<2x96xf32> to vector<2x32xf32>
    %88 = vector.extract_strided_slice %83 {offsets = [0, 64], sizes = [2, 32], strides = [1, 1]} : vector<2x96xf32> to vector<2x32xf32>
    %89 = arith.mulf %87, %69 : vector<2x32xf32>
    %90 = arith.mulf %86, %85 : vector<2x32xf32>
    %91 = arith.addf %89, %90 : vector<2x32xf32>
    %92 = math.tanh %91 : vector<2x32xf32>
    %93 = arith.mulf %88, %92 : vector<2x32xf32>
    %c4_i32 = arith.constant 4 : i32
    %c2_i32_22 = arith.constant 2 : i32
    %94 = arith.muli %c4_i32, %c2_i32_22 : i32
    %95 = tpu.assume_multiple %94, 2 : i32
    %96 = arith.index_cast %95 : i32 to index
    %c0_23 = arith.constant 0 : index
    %97 = vector.load %arg1[%96, %c0_23] : memref<16x128xf32, #tpu.memory_space<vmem>>, vector<2x128xf32>
    %cst_24 = arith.constant dense<0.000000e+00> : vector<2x128xf32>
    %98 = tpu.matmul %93, %3, %cst_24 {dimension_numbers = #tpu.dot_dimension_numbers<[1], [0], [0], [1], [0, 0, 1, 1], [], []>} : vector<2x32xf32>, vector<32x128xf32>, vector<2x128xf32> -> vector<2x128xf32>
    %99 = arith.addf %97, %98 : vector<2x128xf32>
    %100 = vector.extract_strided_slice %99 {offsets = [0, 0], sizes = [2, 96], strides = [1, 1]} : vector<2x128xf32> to vector<2x96xf32>
    %101 = arith.negf %100 : vector<2x96xf32>
    %102 = math.exp %101 : vector<2x96xf32>
    %cst_25 = arith.constant 1.000000e+00 : f32
    %103 = vector.broadcast %cst_25 : f32 to vector<2x96xf32>
    %104 = arith.addf %103, %102 : vector<2x96xf32>
    %105 = arith.divf %103, %104 : vector<2x96xf32>
    %106 = vector.extract_strided_slice %99 {offsets = [0, 96], sizes = [2, 32], strides = [1, 1]} : vector<2x128xf32> to vector<2x32xf32>
    %107 = math.tanh %106 : vector<2x32xf32>
    %108 = vector.extract_strided_slice %105 {offsets = [0, 0], sizes = [2, 32], strides = [1, 1]} : vector<2x96xf32> to vector<2x32xf32>
    %109 = vector.extract_strided_slice %105 {offsets = [0, 32], sizes = [2, 32], strides = [1, 1]} : vector<2x96xf32> to vector<2x32xf32>
    %110 = vector.extract_strided_slice %105 {offsets = [0, 64], sizes = [2, 32], strides = [1, 1]} : vector<2x96xf32> to vector<2x32xf32>
    %111 = arith.mulf %109, %91 : vector<2x32xf32>
    %112 = arith.mulf %108, %107 : vector<2x32xf32>
    %113 = arith.addf %111, %112 : vector<2x32xf32>
    %114 = math.tanh %113 : vector<2x32xf32>
    %115 = arith.mulf %110, %114 : vector<2x32xf32>
    %c5_i32 = arith.constant 5 : i32
    %c2_i32_26 = arith.constant 2 : i32
    %116 = arith.muli %c5_i32, %c2_i32_26 : i32
    %117 = tpu.assume_multiple %116, 2 : i32
    %118 = arith.index_cast %117 : i32 to index
    %c0_27 = arith.constant 0 : index
    %119 = vector.load %arg1[%118, %c0_27] : memref<16x128xf32, #tpu.memory_space<vmem>>, vector<2x128xf32>
    %cst_28 = arith.constant dense<0.000000e+00> : vector<2x128xf32>
    %120 = tpu.matmul %115, %3, %cst_28 {dimension_numbers = #tpu.dot_dimension_numbers<[1], [0], [0], [1], [0, 0, 1, 1], [], []>} : vector<2x32xf32>, vector<32x128xf32>, vector<2x128xf32> -> vector<2x128xf32>
    %121 = arith.addf %119, %120 : vector<2x128xf32>
    %122 = vector.extract_strided_slice %121 {offsets = [0, 0], sizes = [2, 96], strides = [1, 1]} : vector<2x128xf32> to vector<2x96xf32>
    %123 = arith.negf %122 : vector<2x96xf32>
    %124 = math.exp %123 : vector<2x96xf32>
    %cst_29 = arith.constant 1.000000e+00 : f32
    %125 = vector.broadcast %cst_29 : f32 to vector<2x96xf32>
    %126 = arith.addf %125, %124 : vector<2x96xf32>
    %127 = arith.divf %125, %126 : vector<2x96xf32>
    %128 = vector.extract_strided_slice %121 {offsets = [0, 96], sizes = [2, 32], strides = [1, 1]} : vector<2x128xf32> to vector<2x32xf32>
    %129 = math.tanh %128 : vector<2x32xf32>
    %130 = vector.extract_strided_slice %127 {offsets = [0, 0], sizes = [2, 32], strides = [1, 1]} : vector<2x96xf32> to vector<2x32xf32>
    %131 = vector.extract_strided_slice %127 {offsets = [0, 32], sizes = [2, 32], strides = [1, 1]} : vector<2x96xf32> to vector<2x32xf32>
    %132 = vector.extract_strided_slice %127 {offsets = [0, 64], sizes = [2, 32], strides = [1, 1]} : vector<2x96xf32> to vector<2x32xf32>
    %133 = arith.mulf %131, %113 : vector<2x32xf32>
    %134 = arith.mulf %130, %129 : vector<2x32xf32>
    %135 = arith.addf %133, %134 : vector<2x32xf32>
    %136 = math.tanh %135 : vector<2x32xf32>
    %137 = arith.mulf %132, %136 : vector<2x32xf32>
    %c6_i32 = arith.constant 6 : i32
    %c2_i32_30 = arith.constant 2 : i32
    %138 = arith.muli %c6_i32, %c2_i32_30 : i32
    %139 = tpu.assume_multiple %138, 2 : i32
    %140 = arith.index_cast %139 : i32 to index
    %c0_31 = arith.constant 0 : index
    %141 = vector.load %arg1[%140, %c0_31] : memref<16x128xf32, #tpu.memory_space<vmem>>, vector<2x128xf32>
    %cst_32 = arith.constant dense<0.000000e+00> : vector<2x128xf32>
    %142 = tpu.matmul %137, %3, %cst_32 {dimension_numbers = #tpu.dot_dimension_numbers<[1], [0], [0], [1], [0, 0, 1, 1], [], []>} : vector<2x32xf32>, vector<32x128xf32>, vector<2x128xf32> -> vector<2x128xf32>
    %143 = arith.addf %141, %142 : vector<2x128xf32>
    %144 = vector.extract_strided_slice %143 {offsets = [0, 0], sizes = [2, 96], strides = [1, 1]} : vector<2x128xf32> to vector<2x96xf32>
    %145 = arith.negf %144 : vector<2x96xf32>
    %146 = math.exp %145 : vector<2x96xf32>
    %cst_33 = arith.constant 1.000000e+00 : f32
    %147 = vector.broadcast %cst_33 : f32 to vector<2x96xf32>
    %148 = arith.addf %147, %146 : vector<2x96xf32>
    %149 = arith.divf %147, %148 : vector<2x96xf32>
    %150 = vector.extract_strided_slice %143 {offsets = [0, 96], sizes = [2, 32], strides = [1, 1]} : vector<2x128xf32> to vector<2x32xf32>
    %151 = math.tanh %150 : vector<2x32xf32>
    %152 = vector.extract_strided_slice %149 {offsets = [0, 0], sizes = [2, 32], strides = [1, 1]} : vector<2x96xf32> to vector<2x32xf32>
    %153 = vector.extract_strided_slice %149 {offsets = [0, 32], sizes = [2, 32], strides = [1, 1]} : vector<2x96xf32> to vector<2x32xf32>
    %154 = vector.extract_strided_slice %149 {offsets = [0, 64], sizes = [2, 32], strides = [1, 1]} : vector<2x96xf32> to vector<2x32xf32>
    %155 = arith.mulf %153, %135 : vector<2x32xf32>
    %156 = arith.mulf %152, %151 : vector<2x32xf32>
    %157 = arith.addf %155, %156 : vector<2x32xf32>
    %158 = math.tanh %157 : vector<2x32xf32>
    %159 = arith.mulf %154, %158 : vector<2x32xf32>
    %c7_i32 = arith.constant 7 : i32
    %c2_i32_34 = arith.constant 2 : i32
    %160 = arith.muli %c7_i32, %c2_i32_34 : i32
    %161 = tpu.assume_multiple %160, 2 : i32
    %162 = arith.index_cast %161 : i32 to index
    %c0_35 = arith.constant 0 : index
    %163 = vector.load %arg1[%162, %c0_35] : memref<16x128xf32, #tpu.memory_space<vmem>>, vector<2x128xf32>
    %cst_36 = arith.constant dense<0.000000e+00> : vector<2x128xf32>
    %164 = tpu.matmul %159, %3, %cst_36 {dimension_numbers = #tpu.dot_dimension_numbers<[1], [0], [0], [1], [0, 0, 1, 1], [], []>} : vector<2x32xf32>, vector<32x128xf32>, vector<2x128xf32> -> vector<2x128xf32>
    %165 = arith.addf %163, %164 : vector<2x128xf32>
    %166 = vector.extract_strided_slice %165 {offsets = [0, 0], sizes = [2, 96], strides = [1, 1]} : vector<2x128xf32> to vector<2x96xf32>
    %167 = arith.negf %166 : vector<2x96xf32>
    %168 = math.exp %167 : vector<2x96xf32>
    %cst_37 = arith.constant 1.000000e+00 : f32
    %169 = vector.broadcast %cst_37 : f32 to vector<2x96xf32>
    %170 = arith.addf %169, %168 : vector<2x96xf32>
    %171 = arith.divf %169, %170 : vector<2x96xf32>
    %172 = vector.extract_strided_slice %165 {offsets = [0, 96], sizes = [2, 32], strides = [1, 1]} : vector<2x128xf32> to vector<2x32xf32>
    %173 = math.tanh %172 : vector<2x32xf32>
    %174 = vector.extract_strided_slice %171 {offsets = [0, 0], sizes = [2, 32], strides = [1, 1]} : vector<2x96xf32> to vector<2x32xf32>
    %175 = vector.extract_strided_slice %171 {offsets = [0, 32], sizes = [2, 32], strides = [1, 1]} : vector<2x96xf32> to vector<2x32xf32>
    %176 = vector.extract_strided_slice %171 {offsets = [0, 64], sizes = [2, 32], strides = [1, 1]} : vector<2x96xf32> to vector<2x32xf32>
    %177 = arith.mulf %175, %157 : vector<2x32xf32>
    %178 = arith.mulf %174, %173 : vector<2x32xf32>
    %179 = arith.addf %177, %178 : vector<2x32xf32>
    %180 = math.tanh %179 : vector<2x32xf32>
    %181 = arith.mulf %176, %180 : vector<2x32xf32>
    %c8_i32 = arith.constant 8 : i32
    %c0_38 = arith.constant 0 : index
    %c0_39 = arith.constant 0 : index
    %182 = vector.load %arg6[%c0_38, %c0_39] : memref<2x32xf32, #tpu.memory_space<vmem>>, vector<2x32xf32>
    tpu.vector_store %arg6[%c0_38, %c0_39], %181 {strides = array<i32>} : memref<2x32xf32, #tpu.memory_space<vmem>>, vector<2x32xf32>,
    %c0_40 = arith.constant 0 : index
    %c0_41 = arith.constant 0 : index
    %183 = vector.load %arg7[%c0_40, %c0_41] : memref<2x32xf32, #tpu.memory_space<vmem>>, vector<2x32xf32>
    tpu.vector_store %arg7[%c0_40, %c0_41], %179 {strides = array<i32>} : memref<2x32xf32, #tpu.memory_space<vmem>>, vector<2x32xf32>,
    %c0_i32_42 = arith.constant 0 : i32
    %184 = arith.cmpi eq, %arg0, %c0_i32_42 : i32
    %185 = arith.extui %184 : i1 to i32
    %c0_i32_43 = arith.constant 0 : i32
    %186 = arith.cmpi ne, %185, %c0_i32_43 : i32
    scf.if %186 {
      %c0_44 = arith.constant 0 : index
      %c0_45 = arith.constant 0 : index
      %187 = vector.load %arg3[%c0_44, %c0_45] : memref<32x4xf32, #tpu.memory_space<vmem>>, vector<32x4xf32>
      %cst_46 = arith.constant dense<0.000000e+00> : vector<2x4xf32>
      %188 = tpu.matmul %181, %187, %cst_46 {dimension_numbers = #tpu.dot_dimension_numbers<[1], [0], [0], [1], [0, 0, 1, 1], [], []>} : vector<2x32xf32>, vector<32x4xf32>, vector<2x4xf32> -> vector<2x4xf32>
      %c0_47 = arith.constant 0 : index
      %c0_48 = arith.constant 0 : index
      %189 = vector.load %arg4[%c0_47, %c0_48] : memref<1x4xf32, #tpu.memory_space<vmem>>, vector<1x4xf32>
      %190 = vector.broadcast %189 : vector<1x4xf32> to vector<2x4xf32>
      %191 = arith.addf %188, %190 : vector<2x4xf32>
      %c0_49 = arith.constant 0 : index
      %c0_50 = arith.constant 0 : index
      %192 = vector.load %arg5[%c0_49, %c0_50] : memref<2x4xf32, #tpu.memory_space<vmem>>, vector<2x4xf32>
      tpu.vector_store %arg5[%c0_49, %c0_50], %191 {strides = array<i32>} : memref<2x4xf32, #tpu.memory_space<vmem>>, vector<2x4xf32>,
    } else {
    }
    return
  }
  func.func @transform_0(%arg0: i32) -> (i32, i32) {
    %c0_i32 = arith.constant 0 : i32
    %c0_i32_0 = arith.constant 0 : i32
    return %arg0, %c0_i32 : i32, i32
  }
  func.func @transform_1(%arg0: i32) -> (i32, i32) {
    %c0_i32 = arith.constant 0 : i32
    %c0_i32_0 = arith.constant 0 : i32
    %c0_i32_1 = arith.constant 0 : i32
    return %c0_i32, %c0_i32_0 : i32, i32
  }
  func.func @transform_2(%arg0: i32) -> (i32, i32) {
    %c0_i32 = arith.constant 0 : i32
    %c0_i32_0 = arith.constant 0 : i32
    %c0_i32_1 = arith.constant 0 : i32
    return %c0_i32, %c0_i32_0 : i32, i32
  }
  func.func @transform_3(%arg0: i32) -> (i32, i32) {
    %c0_i32 = arith.constant 0 : i32
    %c0_i32_0 = arith.constant 0 : i32
    %c0_i32_1 = arith.constant 0 : i32
    return %c0_i32, %c0_i32_0 : i32, i32
  }
  func.func @transform_4(%arg0: i32) -> (i32, i32) {
    %c0_i32 = arith.constant 0 : i32
    %c0_i32_0 = arith.constant 0 : i32
    %c0_i32_1 = arith.constant 0 : i32
    return %c0_i32, %c0_i32_0 : i32, i32
  }
}

</mosaic_0001>

<llo_original>
// kernel: text_classifier_forward.2
$region0: #{text_classifier_forward.2}
  #allocation0 [shape = 'u32[]', space=smem, size = 0x4, offset = 0x4, fixed_abs, tag = 'smem constant byte address 0x4 - core index']
  #allocation1 [shape = 'u32[144,128]{1,0:T(1,128)}', space=vmem, size = 0x12000, scoped, tag = 'internal scratch']
  %s0 = inlined_call_operand.vmem [shape: f32[16,16], index: 0, kind: input, shape index: {}]
  %s1 = inlined_call_operand.vmem [shape: f32[16,128], index: 1, kind: input, shape index: {}]
  %s2 = inlined_call_operand.vmem [shape: f32[1,128], index: 2, kind: input, shape index: {}]
  %s3 = inlined_call_operand.vmem [shape: f32[16,128], index: 3, kind: output, shape index: {}]
  %s4 = sld [smem:[#allocation0]]
  $region22: #{text_classifier_forward.2} parent=0
    _
  %s6 = ssub.s32 1, %s4
  %s7 = scalar_select 0, %s6, %s4
  // Predicated region
  $region2: #{text_classifier_forward.2} parent=0 // pred_check
    _
  $region3: #{text_classifier_forward.2} parent=0 // pred_check_branch
    %9 = sbr.rel (0) target = $region5
  $region4: #{text_classifier_forward.2} parent=0 // pred_region
    _
  $region5: #{text_classifier_forward.2} parent=0 // pred_fallthru
    _
  // Predicated region
  $region6: #{text_classifier_forward.2} parent=0 // pred_check
    _
  $region7: #{text_classifier_forward.2} parent=0 // pred_check_branch
    %11 = sbr.rel (0) target = $region9
  $region8: #{text_classifier_forward.2} parent=0 // pred_region
    _
  $region9: #{text_classifier_forward.2} parent=0 // pred_fallthru
    _
  // Predicated region
  $region10: #{text_classifier_forward.2} parent=0 // pred_check
    _
  $region11: #{text_classifier_forward.2} parent=0 // pred_check_branch
    %13 = sbr.rel (0) target = $region13
  $region12: #{text_classifier_forward.2} parent=0 // pred_region
    _
  $region13: #{text_classifier_forward.2} parent=0 // pred_fallthru
    _
  %v14 = vld [vmem:[%s0] sm:$0xff]
  %v15 = vld [vmem:[%s0 + $0x8] sm:$0xff]
  %v16 = vld [vmem:[%s1] sm:$0xff]
  %v17 = vld [vmem:[%s1 + $0x8] sm:$0xff]
  %v18 = vld [vmem:[%s2] sm:$0x1]
  %v20 = vlaneseq
  %v21 = vshrl.u32 %v20, 7
  %v22 = vsub.s32 0, %v21
  %v23 = vrot.slane %v18, %v22
  %vm25 = vcmask 130048
  %v27 = vsel %vm25, %v14, 0
  %v30 = vsel %vm25, %v15, 0
  %32 = vmatprep.subr.mxu0 0.0
  %33 = vmatpush1.msra.mxu0 0.0
  %34 = vmatprep.subr.mxu0 0.0
  %35 = vmatpush1.msra.mxu0 0.0
  %36 = vmatprep.subr.mxu0 0.0
  %37 = vmatpush1.msra.mxu0 0.0
  %38 = vmatprep.subr.mxu0 0.0
  %39 = vmatpush1.msra.mxu0 0.0
  %40 = vmatprep.subr.mxu0 0.0
  %41 = vmatpush1.msra.mxu0 0.0
  %42 = vmatprep.subr.mxu0 0.0
  %43 = vmatpush1.msra.mxu0 0.0
  %44 = vmatprep.subr.mxu0 0.0
  %45 = vmatpush1.msra.mxu0 0.0
  %46 = vmatprep.subr.mxu0 0.0
  %47 = vmatpush1.msra.mxu0 0.0
  %48 = vmatprep.subr.mxu0 0.0
  %49 = vmatpush1.msra.mxu0 0.0
  %50 = vmatprep.subr.mxu0 0.0
  %51 = vmatpush1.msra.mxu0 0.0
  %52 = vmatprep.subr.mxu0 0.0
  %53 = vmatpush1.msra.mxu0 0.0
  %54 = vmatprep.subr.mxu0 0.0
  %55 = vmatpush1.msra.mxu0 0.0
  %56 = vmatprep.subr.mxu0 0.0
  %57 = vmatpush1.msra.mxu0 0.0
  %58 = vmatprep.subr.mxu0 0.0
  %59 = vmatpush1.msra.mxu0 0.0
  %60 = vmatprep.subr.mxu0 0.0
  %61 = vmatpush1.msra.mxu0 %v17
  %62 = vmatprep.subr.mxu0 0.0
  %63 = vmatpush1.msra.mxu0 %v16
  %64 = vmatprep.subr.mxu0 0.0
  %65 = vmatpush2.msra.mxu0 0.0
  %66 = vmatprep.subr.mxu0 0.0
  %67 = vmatpush2.msra.mxu0 0.0
  %68 = vmatprep.subr.mxu0 0.0
  %69 = vmatpush2.msra.mxu0 0.0
  %70 = vmatprep.subr.mxu0 0.0
  %71 = vmatpush2.msra.mxu0 0.0
  %72 = vmatprep.subr.mxu0 0.0
  %73 = vmatpush2.msra.mxu0 0.0
  %74 = vmatprep.subr.mxu0 0.0
  %75 = vmatpush2.msra.mxu0 0.0
  %76 = vmatprep.subr.mxu0 0.0
  %77 = vmatpush2.msra.mxu0 0.0
  %78 = vmatprep.subr.mxu0 0.0
  %79 = vmatpush2.msra.mxu0 0.0
  %80 = vmatprep.subr.mxu0 0.0
  %81 = vmatpush2.msra.mxu0 0.0
  %82 = vmatprep.subr.mxu0 0.0
  %83 = vmatpush2.msra.mxu0 0.0
  %84 = vmatprep.subr.mxu0 0.0
  %85 = vmatpush2.msra.mxu0 0.0
  %86 = vmatprep.subr.mxu0 0.0
  %87 = vmatpush2.msra.mxu0 0.0
  %88 = vmatprep.subr.mxu0 0.0
  %89 = vmatpush2.msra.mxu0 0.0
  %90 = vmatprep.subr.mxu0 0.0
  %91 = vmatpush2.msra.mxu0 0.0
  %92 = vmatprep.subr.mxu0 0.0
  %93 = vmatpush2.msra.mxu0 0.0
  %94 = vmatprep.subr.mxu0 0.0
  %95 = vmatpush2.msra.mxu0 0.0
  %96 = vmatprep.mubr.f32.mxu0 0.0
  %97 = vmatmul.mubr.f32.gmra.mxu0 %v27
  %v98 = vpop.f32.mrf.mxu0
  %v99 = vadd.f32 %v23, %v98
  %v100 = vpop.f32.mrf.mxu0
  %101 = vmatprep.mubr.f32.mxu0 0.0
  %102 = vmatmul.mubr.f32.gmra.mxu0 %v30
  %v103 = vpop.f32.mrf.mxu0
  %v104 = vadd.f32 %v23, %v103
  %v105 = vpop.f32.mrf.mxu0
  %106 = vdwg.mxu0
  %107 = vst [vmem:[%s3] sm:$0xff] %v99
  %108 = vst [vmem:[%s3 + $0x8] sm:$0xff] %v104
  // Predicated region
  $region14: #{text_classifier_forward.2} parent=0 // pred_check
    _
  $region15: #{text_classifier_forward.2} parent=0 // pred_check_branch
    %110 = sbr.rel (0) target = $region17
  $region16: #{text_classifier_forward.2} parent=0 // pred_region
    _
  $region17: #{text_classifier_forward.2} parent=0 // pred_fallthru
    _
  // Predicated region
  $region18: #{text_classifier_forward.2} parent=0 // pred_check
    _
  $region19: #{text_classifier_forward.2} parent=0 // pred_check_branch
    %112 = sbr.rel (0) target = $region21
  $region20: #{text_classifier_forward.2} parent=0 // pred_region
    _
  $region21: #{text_classifier_forward.2} parent=0 // pred_fallthru
    _

// kernel: text_classifier_forward.3
$region0: #{text_classifier_forward.3}
  #allocation0 [shape = 'u32[]', space=smem, size = 0x4, offset = 0x4, fixed_abs, tag = 'smem constant byte address 0x4 - core index']
  #allocation1 [shape = 'u32[144,128]{1,0:T(1,128)}', space=vmem, size = 0x12000, scoped, tag = 'internal scratch']
  #allocation2 [shape = 'f32[2,32]{1,0:T(2,128)}', space=vmem, size = 0x400, scoped, tag = 'scratch operand']
  #allocation3 [shape = 'f32[2,32]{1,0:T(2,128)}', space=vmem, size = 0x400, scoped, tag = 'scratch operand']
  %s0 = inlined_call_operand.vmem [shape: f32[16,128], index: 0, kind: input, shape index: {}]
  %s1 = inlined_call_operand.vmem [shape: f32[32,128], index: 1, kind: input, shape index: {}]
  %s2 = inlined_call_operand.vmem [shape: f32[32,4], index: 2, kind: input, shape index: {}]
  %s3 = inlined_call_operand.vmem [shape: f32[1,4], index: 3, kind: input, shape index: {}]
  %s4 = inlined_call_operand.hbm [shape: f32[2,4], index: 4, kind: output, shape index: {}]
  %s5 = sld [smem:[#allocation0]]
  $region34: #{text_classifier_forward.3} parent=0
    _
  %s7 = ssub.s32 1, %s5
  %s8 = scalar_select 0, %s7, %s5
  $region1: #{text_classifier_forward.3} parent=0
    #allocation4 [shape = 'u8[1024]{0}', space=vmem, size = 0x400, scoped, tag = 'output window, operand 0, single buffered']
    #allocation5 [shape = 's32[1]{0}', space=sflag, size = 0x4, scoped, tag = 'scoped memory for text_classifier_forward.3']
    %9 = vsyncpa [#allocation5], 0
    // Predicated region
    $region2: #{text_classifier_forward.3} parent=1 // pred_check
      _
    $region3: #{text_classifier_forward.3} parent=1 // pred_check_branch
      %11 = sbr.rel (0) target = $region5
    $region4: #{text_classifier_forward.3} parent=1 // pred_region
      _
    $region5: #{text_classifier_forward.3} parent=1 // pred_fallthru
      _
    // Predicated region
    $region6: #{text_classifier_forward.3} parent=1 // pred_check
      _
    $region7: #{text_classifier_forward.3} parent=1 // pred_check_branch
      %13 = sbr.rel (0) target = $region9
    $region8: #{text_classifier_forward.3} parent=1 // pred_region
      _
    $region9: #{text_classifier_forward.3} parent=1 // pred_fallthru
      _
    // Predicated region
    $region10: #{text_classifier_forward.3} parent=1 // pred_check
      _
    $region11: #{text_classifier_forward.3} parent=1 // pred_check_branch
      %15 = sbr.rel (0) target = $region13
    $region12: #{text_classifier_forward.3} parent=1 // pred_region
      _
    $region13: #{text_classifier_forward.3} parent=1 // pred_fallthru
      _
    // Predicated region
    $region14: #{text_classifier_forward.3} parent=1 // pred_check
      _
    $region15: #{text_classifier_forward.3} parent=1 // pred_check_branch
      %17 = sbr.rel (0) target = $region17
    $region16: #{text_classifier_forward.3} parent=1 // pred_region
      _
    $region17: #{text_classifier_forward.3} parent=1 // pred_fallthru
      _
    %p18 = scmp.eq.s32.totalorder 0, 0
    // Predicated region
    $region18: #{text_classifier_forward.3} parent=1 // pred_check
      %p19 = pneg %p18
    $region19: #{text_classifier_forward.3} parent=1 // pred_check_branch
      %21 = sbr.rel (%p19) target = $region21
    $region20: #{text_classifier_forward.3} parent=1 // pred_region
      %vm22 = vcmask 254976
      %23 = vst.msk [vmem:[#allocation2] sm:$0x3] %vm22, 0.0
      %24 = vst.msk [vmem:[#allocation3] sm:$0x3] %vm22, 0.0
    $region21: #{text_classifier_forward.3} parent=1 // pred_fallthru
      _
    %v25 = vld [vmem:[%s1] sm:$0xff]
    %v26 = vld [vmem:[%s1 + $0x8] sm:$0xff]
    %v27 = vld [vmem:[%s1 + $0x10] sm:$0xff]
    %v28 = vld [vmem:[%s1 + $0x18] sm:$0xff]
    %v29 = vld [vmem:[#allocation2] sm:$0x3]
    %v30 = vld [vmem:[#allocation3] sm:$0x3]
    %v31 = vld [vmem:[%s0] sm:$0x3]
    %vm32 = vcmask 261120
    %v34 = vsel %vm32, %v29, 0
    %36 = vmatprep.subr.mxu0 0.0
    %37 = vmatpush1.msra.mxu0 0.0
    %38 = vmatprep.subr.mxu0 0.0
    %39 = vmatpush1.msra.mxu0 0.0
    %40 = vmatprep.subr.mxu0 0.0
    %41 = vmatpush1.msra.mxu0 0.0
    %42 = vmatprep.subr.mxu0 0.0
    %43 = vmatpush1.msra.mxu0 0.0
    %44 = vmatprep.subr.mxu0 0.0
    %45 = vmatpush1.msra.mxu0 0.0
    %46 = vmatprep.subr.mxu0 0.0
    %47 = vmatpush1.msra.mxu0 0.0
    %48 = vmatprep.subr.mxu0 0.0
    %49 = vmatpush1.msra.mxu0 0.0
    %50 = vmatprep.subr.mxu0 0.0
    %51 = vmatpush1.msra.mxu0 0.0
    %52 = vmatprep.subr.mxu0 0.0
    %53 = vmatpush1.msra.mxu0 0.0
    %54 = vmatprep.subr.mxu0 0.0
    %55 = vmatpush1.msra.mxu0 0.0
    %56 = vmatprep.subr.mxu0 0.0
    %57 = vmatpush1.msra.mxu0 0.0
    %58 = vmatprep.subr.mxu0 0.0
    %59 = vmatpush1.msra.mxu0 0.0
    %60 = vmatprep.subr.mxu0 0.0
    %61 = vmatpush1.msra.mxu0 %v28
    %62 = vmatprep.subr.mxu0 0.0
    %63 = vmatpush1.msra.mxu0 %v27
    %64 = vmatprep.subr.mxu0 0.0
    %65 = vmatpush1.msra.mxu0 %v26
    %66 = vmatprep.subr.mxu0 0.0
    %67 = vmatpush1.msra.mxu0 %v25
    %68 = vmatprep.subr.mxu0 0.0
    %69 = vmatpush2.msra.mxu0 0.0
    %70 = vmatprep.subr.mxu0 0.0
    %71 = vmatpush2.msra.mxu0 0.0
    %72 = vmatprep.subr.mxu0 0.0
    %73 = vmatpush2.msra.mxu0 0.0
    %74 = vmatprep.subr.mxu0 0.0
    %75 = vmatpush2.msra.mxu0 0.0
    %76 = vmatprep.subr.mxu0 0.0
    %77 = vmatpush2.msra.mxu0 0.0
    %78 = vmatprep.subr.mxu0 0.0
    %79 = vmatpush2.msra.mxu0 0.0
    %80 = vmatprep.subr.mxu0 0.0
    %81 = vmatpush2.msra.mxu0 0.0
    %82 = vmatprep.subr.mxu0 0.0
    %83 = vmatpush2.msra.mxu0 0.0
    %84 = vmatprep.subr.mxu0 0.0
    %85 = vmatpush2.msra.mxu0 0.0
    %86 = vmatprep.subr.mxu0 0.0
    %87 = vmatpush2.msra.mxu0 0.0
    %88 = vmatprep.subr.mxu0 0.0
    %89 = vmatpush2.msra.mxu0 0.0
    %90 = vmatprep.subr.mxu0 0.0
    %91 = vmatpush2.msra.mxu0 0.0
    %92 = vmatprep.subr.mxu0 0.0
    %93 = vmatpush2.msra.mxu0 0.0
    %94 = vmatprep.subr.mxu0 0.0
    %95 = vmatpush2.msra.mxu0 0.0
    %96 = vmatprep.subr.mxu0 0.0
    %97 = vmatpush2.msra.mxu0 0.0
    %98 = vmatprep.subr.mxu0 0.0
    %99 = vmatpush2.msra.mxu0 0.0
    %100 = vmatprep.mubr.f32.mxu0 0.0
    %101 = vmatmul.mubr.f32.gmra.mxu0 %v34
    %v102 = vpop.f32.mrf.mxu0
    %v103 = vadd.f32 0.0, %v102
    %v104 = vpop.f32.mrf.mxu0
    %105 = vdwg.mxu0
    %v106 = vadd.f32 %v31, %v103
    %v107 = vxor.u32 %v106, 2147483648
    %v108 = vmul.f32 %v107, 1.442695
    %v109 = vpow.pop %v108
    %v110 = vadd.f32 %v109, 1.0
    %v111 = vrcp.pop %v110
    %v112 = vmul.f32 1.0, %v111
    %v113 = vtanh.pop %v106
    %115 = vrot.lane.b32.xlu0 %v30, 32
    %v116 = vpop.permute.xlu0 %115
    %v118 = vmul.f32 %v112, %v116
    %120 = vrot.lane.b32.xlu0 %v113, 32
    %v121 = vpop.permute.xlu0 %120
    %v123 = vmul.f32 %v112, %v121
    %125 = vrot.lane.b32.xlu0 %v123, 32
    %v126 = vpop.permute.xlu0 %125
    %v128 = vadd.f32 %v118, %v126
    %v129 = vtanh.pop %v128
    %131 = vrot.lane.b32.xlu0 %v129, 32
    %v132 = vpop.permute.xlu0 %131
    %v134 = vmul.f32 %v112, %v132
    %s135 = scalar_lea.vmem %s0, 2
    %v136 = vld [vmem:[%s135] sm:$0x3]
    %138 = vrot.lane.b32.xlu0 %v134, 64
    %v139 = vpop.permute.xlu0 %138
    %v140 = vsel %vm32, %v139, 0
    %142 = vmatprep.subr.mxu0 0.0
    %143 = vmatpush1.msra.mxu0 0.0
    %144 = vmatprep.subr.mxu0 0.0
    %145 = vmatpush1.msra.mxu0 0.0
    %146 = vmatprep.subr.mxu0 0.0
    %147 = vmatpush1.msra.mxu0 0.0
    %148 = vmatprep.subr.mxu0 0.0
    %149 = vmatpush1.msra.mxu0 0.0
    %150 = vmatprep.subr.mxu0 0.0
    %151 = vmatpush1.msra.mxu0 0.0
    %152 = vmatprep.subr.mxu0 0.0
    %153 = vmatpush1.msra.mxu0 0.0
    %154 = vmatprep.subr.mxu0 0.0
    %155 = vmatpush1.msra.mxu0 0.0
    %156 = vmatprep.subr.mxu0 0.0
    %157 = vmatpush1.msra.mxu0 0.0
    %158 = vmatprep.subr.mxu0 0.0
    %159 = vmatpush1.msra.mxu0 0.0
    %160 = vmatprep.subr.mxu0 0.0
    %161 = vmatpush1.msra.mxu0 0.0
    %162 = vmatprep.subr.mxu0 0.0
    %163 = vmatpush1.msra.mxu0 0.0
    %164 = vmatprep.subr.mxu0 0.0
    %165 = vmatpush1.msra.mxu0 0.0
    %166 = vmatprep.subr.mxu0 0.0
    %167 = vmatpush1.msra.mxu0 %v28
    %168 = vmatprep.subr.mxu0 0.0
    %169 = vmatpush1.msra.mxu0 %v27
    %170 = vmatprep.subr.mxu0 0.0
    %171 = vmatpush1.msra.mxu0 %v26
    %172 = vmatprep.subr.mxu0 0.0
    %173 = vmatpush1.msra.mxu0 %v25
    %174 = vmatprep.subr.mxu0 0.0
    %175 = vmatpush2.msra.mxu0 0.0
    %176 = vmatprep.subr.mxu0 0.0
    %177 = vmatpush2.msra.mxu0 0.0
    %178 = vmatprep.subr.mxu0 0.0
    %179 = vmatpush2.msra.mxu0 0.0
    %180 = vmatprep.subr.mxu0 0.0
    %181 = vmatpush2.msra.mxu0 0.0
    %182 = vmatprep.subr.mxu0 0.0
    %183 = vmatpush2.msra.mxu0 0.0
    %184 = vmatprep.subr.mxu0 0.0
    %185 = vmatpush2.msra.mxu0 0.0
    %186 = vmatprep.subr.mxu0 0.0
    %187 = vmatpush2.msra.mxu0 0.0
    %188 = vmatprep.subr.mxu0 0.0
    %189 = vmatpush2.msra.mxu0 0.0
    %190 = vmatprep.subr.mxu0 0.0
    %191 = vmatpush2.msra.mxu0 0.0
    %192 = vmatprep.subr.mxu0 0.0
    %193 = vmatpush2.msra.mxu0 0.0
    %194 = vmatprep.subr.mxu0 0.0
    %195 = vmatpush2.msra.mxu0 0.0
    %196 = vmatprep.subr.mxu0 0.0
    %197 = vmatpush2.msra.mxu0 0.0
    %198 = vmatprep.subr.mxu0 0.0
    %199 = vmatpush2.msra.mxu0 0.0
    %200 = vmatprep.subr.mxu0 0.0
    %201 = vmatpush2.msra.mxu0 0.0
    %202 = vmatprep.subr.mxu0 0.0
    %203 = vmatpush2.msra.mxu0 0.0
    %204 = vmatprep.subr.mxu0 0.0
    %205 = vmatpush2.msra.mxu0 0.0
    %206 = vmatprep.mubr.f32.mxu0 0.0
    %207 = vmatmul.mubr.f32.gmra.mxu0 %v140
    %v208 = vpop.f32.mrf.mxu0
    %v209 = vadd.f32 0.0, %v208
    %v210 = vpop.f32.mrf.mxu0
    %211 = vdwg.mxu0
    %v212 = vadd.f32 %v136, %v209
    %v213 = vxor.u32 %v212, 2147483648
    %v214 = vmul.f32 %v213, 1.442695
    %v215 = vpow.pop %v214
    %v216 = vadd.f32 %v215, 1.0
    %v217 = vrcp.pop %v216
    %v218 = vmul.f32 1.0, %v217
    %v219 = vtanh.pop %v212
    %v220 = vmul.f32 %v218, %v128
    %222 = vrot.lane.b32.xlu0 %v219, 32
    %v223 = vpop.permute.xlu0 %222
    %v225 = vmul.f32 %v218, %v223
    %227 = vrot.lane.b32.xlu0 %v225, 32
    %v228 = vpop.permute.xlu0 %227
    %v230 = vadd.f32 %v220, %v228
    %v231 = vtanh.pop %v230
    %233 = vrot.lane.b32.xlu0 %v231, 32
    %v234 = vpop.permute.xlu0 %233
    %v236 = vmul.f32 %v218, %v234
    %s237 = scalar_lea.vmem %s0, 4
    %v238 = vld [vmem:[%s237] sm:$0x3]
    %240 = vrot.lane.b32.xlu0 %v236, 64
    %v241 = vpop.permute.xlu0 %240
    %v242 = vsel %vm32, %v241, 0
    %244 = vmatprep.subr.mxu0 0.0
    %245 = vmatpush1.msra.mxu0 0.0
    %246 = vmatprep.subr.mxu0 0.0
    %247 = vmatpush1.msra.mxu0 0.0
    %248 = vmatprep.subr.mxu0 0.0
    %249 = vmatpush1.msra.mxu0 0.0
    %250 = vmatprep.subr.mxu0 0.0
    %251 = vmatpush1.msra.mxu0 0.0
    %252 = vmatprep.subr.mxu0 0.0
    %253 = vmatpush1.msra.mxu0 0.0
    %254 = vmatprep.subr.mxu0 0.0
    %255 = vmatpush1.msra.mxu0 0.0
    %256 = vmatprep.subr.mxu0 0.0
    %257 = vmatpush1.msra.mxu0 0.0
    %258 = vmatprep.subr.mxu0 0.0
    %259 = vmatpush1.msra.mxu0 0.0
    %260 = vmatprep.subr.mxu0 0.0
    %261 = vmatpush1.msra.mxu0 0.0
    %262 = vmatprep.subr.mxu0 0.0
    %263 = vmatpush1.msra.mxu0 0.0
    %264 = vmatprep.subr.mxu0 0.0
    %265 = vmatpush1.msra.mxu0 0.0
    %266 = vmatprep.subr.mxu0 0.0
    %267 = vmatpush1.msra.mxu0 0.0
    %268 = vmatprep.subr.mxu0 0.0
    %269 = vmatpush1.msra.mxu0 %v28
    %270 = vmatprep.subr.mxu0 0.0
    %271 = vmatpush1.msra.mxu0 %v27
    %272 = vmatprep.subr.mxu0 0.0
    %273 = vmatpush1.msra.mxu0 %v26
    %274 = vmatprep.subr.mxu0 0.0
    %275 = vmatpush1.msra.mxu0 %v25
    %276 = vmatprep.subr.mxu0 0.0
    %277 = vmatpush2.msra.mxu0 0.0
    %278 = vmatprep.subr.mxu0 0.0
    %279 = vmatpush2.msra.mxu0 0.0
    %280 = vmatprep.subr.mxu0 0.0
    %281 = vmatpush2.msra.mxu0 0.0
    %282 = vmatprep.subr.mxu0 0.0
    %283 = vmatpush2.msra.mxu0 0.0
    %284 = vmatprep.subr.mxu0 0.0
    %285 = vmatpush2.msra.mxu0 0.0
    %286 = vmatprep.subr.mxu0 0.0
    %287 = vmatpush2.msra.mxu0 0.0
    %288 = vmatprep.subr.mxu0 0.0
    %289 = vmatpush2.msra.mxu0 0.0
    %290 = vmatprep.subr.mxu0 0.0
    %291 = vmatpush2.msra.mxu0 0.0
    %292 = vmatprep.subr.mxu0 0.0
    %293 = vmatpush2.msra.mxu0 0.0
    %294 = vmatprep.subr.mxu0 0.0
    %295 = vmatpush2.msra.mxu0 0.0
    %296 = vmatprep.subr.mxu0 0.0
    %297 = vmatpush2.msra.mxu0 0.0
    %298 = vmatprep.subr.mxu0 0.0
    %299 = vmatpush2.msra.mxu0 0.0
    %300 = vmatprep.subr.mxu0 0.0
    %301 = vmatpush2.msra.mxu0 0.0
    %302 = vmatprep.subr.mxu0 0.0
    %303 = vmatpush2.msra.mxu0 0.0
    %304 = vmatprep.subr.mxu0 0.0
    %305 = vmatpush2.msra.mxu0 0.0
    %306 = vmatprep.subr.mxu0 0.0
    %307 = vmatpush2.msra.mxu0 0.0
    %308 = vmatprep.mubr.f32.mxu0 0.0
    %309 = vmatmul.mubr.f32.gmra.mxu0 %v242
    %v310 = vpop.f32.mrf.mxu0
    %v311 = vadd.f32 0.0, %v310
    %v312 = vpop.f32.mrf.mxu0
    %313 = vdwg.mxu0
    %v314 = vadd.f32 %v238, %v311
    %v315 = vxor.u32 %v314, 2147483648
    %v316 = vmul.f32 %v315, 1.442695
    %v317 = vpow.pop %v316
    %v318 = vadd.f32 %v317, 1.0
    %v319 = vrcp.pop %v318
    %v320 = vmul.f32 1.0, %v319
    %v321 = vtanh.pop %v314
    %v322 = vmul.f32 %v320, %v230
    %324 = vrot.lane.b32.xlu0 %v321, 32
    %v325 = vpop.permute.xlu0 %324
    %v327 = vmul.f32 %v320, %v325
    %329 = vrot.lane.b32.xlu0 %v327, 32
    %v330 = vpop.permute.xlu0 %329
    %v332 = vadd.f32 %v322, %v330
    %v333 = vtanh.pop %v332
    %335 = vrot.lane.b32.xlu0 %v333, 32
    %v336 = vpop.permute.xlu0 %335
    %v338 = vmul.f32 %v320, %v336
    %s339 = scalar_lea.vmem %s0, 6
    %v340 = vld [vmem:[%s339] sm:$0x3]
    %342 = vrot.lane.b32.xlu0 %v338, 64
    %v343 = vpop.permute.xlu0 %342
    %v344 = vsel %vm32, %v343, 0
    %346 = vmatprep.subr.mxu0 0.0
    %347 = vmatpush1.msra.mxu0 0.0
    %348 = vmatprep.subr.mxu0 0.0
    %349 = vmatpush1.msra.mxu0 0.0
    %350 = vmatprep.subr.mxu0 0.0
    %351 = vmatpush1.msra.mxu0 0.0
    %352 = vmatprep.subr.mxu0 0.0
    %353 = vmatpush1.msra.mxu0 0.0
    %354 = vmatprep.subr.mxu0 0.0
    %355 = vmatpush1.msra.mxu0 0.0
    %356 = vmatprep.subr.mxu0 0.0
    %357 = vmatpush1.msra.mxu0 0.0
    %358 = vmatprep.subr.mxu0 0.0
    %359 = vmatpush1.msra.mxu0 0.0
    %360 = vmatprep.subr.mxu0 0.0
    %361 = vmatpush1.msra.mxu0 0.0
    %362 = vmatprep.subr.mxu0 0.0
    %363 = vmatpush1.msra.mxu0 0.0
    %364 = vmatprep.subr.mxu0 0.0
    %365 = vmatpush1.msra.mxu0 0.0
    %366 = vmatprep.subr.mxu0 0.0
    %367 = vmatpush1.msra.mxu0 0.0
    %368 = vmatprep.subr.mxu0 0.0
    %369 = vmatpush1.msra.mxu0 0.0
    %370 = vmatprep.subr.mxu0 0.0
    %371 = vmatpush1.msra.mxu0 %v28
    %372 = vmatprep.subr.mxu0 0.0
    %373 = vmatpush1.msra.mxu0 %v27
    %374 = vmatprep.subr.mxu0 0.0
    %375 = vmatpush1.msra.mxu0 %v26
    %376 = vmatprep.subr.mxu0 0.0
    %377 = vmatpush1.msra.mxu0 %v25
    %378 = vmatprep.subr.mxu0 0.0
    %379 = vmatpush2.msra.mxu0 0.0
    %380 = vmatprep.subr.mxu0 0.0
    %381 = vmatpush2.msra.mxu0 0.0
    %382 = vmatprep.subr.mxu0 0.0
    %383 = vmatpush2.msra.mxu0 0.0
    %384 = vmatprep.subr.mxu0 0.0
    %385 = vmatpush2.msra.mxu0 0.0
    %386 = vmatprep.subr.mxu0 0.0
    %387 = vmatpush2.msra.mxu0 0.0
    %388 = vmatprep.subr.mxu0 0.0
    %389 = vmatpush2.msra.mxu0 0.0
    %390 = vmatprep.subr.mxu0 0.0
    %391 = vmatpush2.msra.mxu0 0.0
    %392 = vmatprep.subr.mxu0 0.0
    %393 = vmatpush2.msra.mxu0 0.0
    %394 = vmatprep.subr.mxu0 0.0
    %395 = vmatpush2.msra.mxu0 0.0
    %396 = vmatprep.subr.mxu0 0.0
    %397 = vmatpush2.msra.mxu0 0.0
    %398 = vmatprep.subr.mxu0 0.0
    %399 = vmatpush2.msra.mxu0 0.0
    %400 = vmatprep.subr.mxu0 0.0
    %401 = vmatpush2.msra.mxu0 0.0
    %402 = vmatprep.subr.mxu0 0.0
    %403 = vmatpush2.msra.mxu0 0.0
    %404 = vmatprep.subr.mxu0 0.0
    %405 = vmatpush2.msra.mxu0 0.0
    %406 = vmatprep.subr.mxu0 0.0
    %407 = vmatpush2.msra.mxu0 0.0
    %408 = vmatprep.subr.mxu0 0.0
    %409 = vmatpush2.msra.mxu0 0.0
    %410 = vmatprep.mubr.f32.mxu0 0.0
    %411 = vmatmul.mubr.f32.gmra.mxu0 %v344
    %v412 = vpop.f32.mrf.mxu0
    %v413 = vadd.f32 0.0, %v412
    %v414 = vpop.f32.mrf.mxu0
    %415 = vdwg.mxu0
    %v416 = vadd.f32 %v340, %v413
    %v417 = vxor.u32 %v416, 2147483648
    %v418 = vmul.f32 %v417, 1.442695
    %v419 = vpow.pop %v418
    %v420 = vadd.f32 %v419, 1.0
    %v421 = vrcp.pop %v420
    %v422 = vmul.f32 1.0, %v421
    %v423 = vtanh.pop %v416
    %v424 = vmul.f32 %v422, %v332
    %426 = vrot.lane.b32.xlu0 %v423, 32
    %v427 = vpop.permute.xlu0 %426
    %v429 = vmul.f32 %v422, %v427
    %431 = vrot.lane.b32.xlu0 %v429, 32
    %v432 = vpop.permute.xlu0 %431
    %v434 = vadd.f32 %v424, %v432
    %v435 = vtanh.pop %v434
    %437 = vrot.lane.b32.xlu0 %v435, 32
    %v438 = vpop.permute.xlu0 %437
    %v440 = vmul.f32 %v422, %v438
    %s441 = scalar_lea.vmem %s0, 8
    %v442 = vld [vmem:[%s441] sm:$0x3]
    %444 = vrot.lane.b32.xlu0 %v440, 64
    %v445 = vpop.permute.xlu0 %444
    %v446 = vsel %vm32, %v445, 0
    %448 = vmatprep.subr.mxu0 0.0
    %449 = vmatpush1.msra.mxu0 0.0
    %450 = vmatprep.subr.mxu0 0.0
    %451 = vmatpush1.msra.mxu0 0.0
    %452 = vmatprep.subr.mxu0 0.0
    %453 = vmatpush1.msra.mxu0 0.0
    %454 = vmatprep.subr.mxu0 0.0
    %455 = vmatpush1.msra.mxu0 0.0
    %456 = vmatprep.subr.mxu0 0.0
    %457 = vmatpush1.msra.mxu0 0.0
    %458 = vmatprep.subr.mxu0 0.0
    %459 = vmatpush1.msra.mxu0 0.0
    %460 = vmatprep.subr.mxu0 0.0
    %461 = vmatpush1.msra.mxu0 0.0
    %462 = vmatprep.subr.mxu0 0.0
    %463 = vmatpush1.msra.mxu0 0.0
    %464 = vmatprep.subr.mxu0 0.0
    %465 = vmatpush1.msra.mxu0 0.0
    %466 = vmatprep.subr.mxu0 0.0
    %467 = vmatpush1.msra.mxu0 0.0
    %468 = vmatprep.subr.mxu0 0.0
    %469 = vmatpush1.msra.mxu0 0.0
    %470 = vmatprep.subr.mxu0 0.0
    %471 = vmatpush1.msra.mxu0 0.0
    %472 = vmatprep.subr.mxu0 0.0
    %473 = vmatpush1.msra.mxu0 %v28
    %474 = vmatprep.subr.mxu0 0.0
    %475 = vmatpush1.msra.mxu0 %v27
    %476 = vmatprep.subr.mxu0 0.0
    %477 = vmatpush1.msra.mxu0 %v26
    %478 = vmatprep.subr.mxu0 0.0
    %479 = vmatpush1.msra.mxu0 %v25
    %480 = vmatprep.subr.mxu0 0.0
    %481 = vmatpush2.msra.mxu0 0.0
    %482 = vmatprep.subr.mxu0 0.0
    %483 = vmatpush2.msra.mxu0 0.0
    %484 = vmatprep.subr.mxu0 0.0
    %485 = vmatpush2.msra.mxu0 0.0
    %486 = vmatprep.subr.mxu0 0.0
    %487 = vmatpush2.msra.mxu0 0.0
    %488 = vmatprep.subr.mxu0 0.0
    %489 = vmatpush2.msra.mxu0 0.0
    %490 = vmatprep.subr.mxu0 0.0
    %491 = vmatpush2.msra.mxu0 0.0
    %492 = vmatprep.subr.mxu0 0.0
    %493 = vmatpush2.msra.mxu0 0.0
    %494 = vmatprep.subr.mxu0 0.0
    %495 = vmatpush2.msra.mxu0 0.0
    %496 = vmatprep.subr.mxu0 0.0
    %497 = vmatpush2.msra.mxu0 0.0
    %498 = vmatprep.subr.mxu0 0.0
    %499 = vmatpush2.msra.mxu0 0.0
    %500 = vmatprep.subr.mxu0 0.0
    %501 = vmatpush2.msra.mxu0 0.0
    %502 = vmatprep.subr.mxu0 0.0
    %503 = vmatpush2.msra.mxu0 0.0
    %504 = vmatprep.subr.mxu0 0.0
    %505 = vmatpush2.msra.mxu0 0.0
    %506 = vmatprep.subr.mxu0 0.0
    %507 = vmatpush2.msra.mxu0 0.0
    %508 = vmatprep.subr.mxu0 0.0
    %509 = vmatpush2.msra.mxu0 0.0
    %510 = vmatprep.subr.mxu0 0.0
    %511 = vmatpush2.msra.mxu0 0.0
    %512 = vmatprep.mubr.f32.mxu0 0.0
    %513 = vmatmul.mubr.f32.gmra.mxu0 %v446
    %v514 = vpop.f32.mrf.mxu0
    %v515 = vadd.f32 0.0, %v514
    %v516 = vpop.f32.mrf.mxu0
    %517 = vdwg.mxu0
    %v518 = vadd.f32 %v442, %v515
    %v519 = vxor.u32 %v518, 2147483648
    %v520 = vmul.f32 %v519, 1.442695
    %v521 = vpow.pop %v520
    %v522 = vadd.f32 %v521, 1.0
    %v523 = vrcp.pop %v522
    %v524 = vmul.f32 1.0, %v523
    %v525 = vtanh.pop %v518
    %v526 = vmul.f32 %v524, %v434
    %528 = vrot.lane.b32.xlu0 %v525, 32
    %v529 = vpop.permute.xlu0 %528
    %v531 = vmul.f32 %v524, %v529
    %533 = vrot.lane.b32.xlu0 %v531, 32
    %v534 = vpop.permute.xlu0 %533
    %v536 = vadd.f32 %v526, %v534
    %v537 = vtanh.pop %v536
    %539 = vrot.lane.b32.xlu0 %v537, 32
    %v540 = vpop.permute.xlu0 %539
    %v542 = vmul.f32 %v524, %v540
    %s543 = scalar_lea.vmem %s0, 10
    %v544 = vld [vmem:[%s543] sm:$0x3]
    %546 = vrot.lane.b32.xlu0 %v542, 64
    %v547 = vpop.permute.xlu0 %546
    %v548 = vsel %vm32, %v547, 0
    %550 = vmatprep.subr.mxu0 0.0
    %551 = vmatpush1.msra.mxu0 0.0
    %552 = vmatprep.subr.mxu0 0.0
    %553 = vmatpush1.msra.mxu0 0.0
    %554 = vmatprep.subr.mxu0 0.0
    %555 = vmatpush1.msra.mxu0 0.0
    %556 = vmatprep.subr.mxu0 0.0
    %557 = vmatpush1.msra.mxu0 0.0
    %558 = vmatprep.subr.mxu0 0.0
    %559 = vmatpush1.msra.mxu0 0.0
    %560 = vmatprep.subr.mxu0 0.0
    %561 = vmatpush1.msra.mxu0 0.0
    %562 = vmatprep.subr.mxu0 0.0
    %563 = vmatpush1.msra.mxu0 0.0
    %564 = vmatprep.subr.mxu0 0.0
    %565 = vmatpush1.msra.mxu0 0.0
    %566 = vmatprep.subr.mxu0 0.0
    %567 = vmatpush1.msra.mxu0 0.0
    %568 = vmatprep.subr.mxu0 0.0
    %569 = vmatpush1.msra.mxu0 0.0
    %570 = vmatprep.subr.mxu0 0.0
    %571 = vmatpush1.msra.mxu0 0.0
    %572 = vmatprep.subr.mxu0 0.0
    %573 = vmatpush1.msra.mxu0 0.0
    %574 = vmatprep.subr.mxu0 0.0
    %575 = vmatpush1.msra.mxu0 %v28
    %576 = vmatprep.subr.mxu0 0.0
    %577 = vmatpush1.msra.mxu0 %v27
    %578 = vmatprep.subr.mxu0 0.0
    %579 = vmatpush1.msra.mxu0 %v26
    %580 = vmatprep.subr.mxu0 0.0
    %581 = vmatpush1.msra.mxu0 %v25
    %582 = vmatprep.subr.mxu0 0.0
    %583 = vmatpush2.msra.mxu0 0.0
    %584 = vmatprep.subr.mxu0 0.0
    %585 = vmatpush2.msra.mxu0 0.0
    %586 = vmatprep.subr.mxu0 0.0
    %587 = vmatpush2.msra.mxu0 0.0
    %588 = vmatprep.subr.mxu0 0.0
    %589 = vmatpush2.msra.mxu0 0.0
    %590 = vmatprep.subr.mxu0 0.0
    %591 = vmatpush2.msra.mxu0 0.0
    %592 = vmatprep.subr.mxu0 0.0
    %593 = vmatpush2.msra.mxu0 0.0
    %594 = vmatprep.subr.mxu0 0.0
    %595 = vmatpush2.msra.mxu0 0.0
    %596 = vmatprep.subr.mxu0 0.0
    %597 = vmatpush2.msra.mxu0 0.0
    %598 = vmatprep.subr.mxu0 0.0
    %599 = vmatpush2.msra.mxu0 0.0
    %600 = vmatprep.subr.mxu0 0.0
    %601 = vmatpush2.msra.mxu0 0.0
    %602 = vmatprep.subr.mxu0 0.0
    %603 = vmatpush2.msra.mxu0 0.0
    %604 = vmatprep.subr.mxu0 0.0
    %605 = vmatpush2.msra.mxu0 0.0
    %606 = vmatprep.subr.mxu0 0.0
    %607 = vmatpush2.msra.mxu0 0.0
    %608 = vmatprep.subr.mxu0 0.0
    %609 = vmatpush2.msra.mxu0 0.0
    %610 = vmatprep.subr.mxu0 0.0
    %611 = vmatpush2.msra.mxu0 0.0
    %612 = vmatprep.subr.mxu0 0.0
    %613 = vmatpush2.msra.mxu0 0.0
    %614 = vmatprep.mubr.f32.mxu0 0.0
    %615 = vmatmul.mubr.f32.gmra.mxu0 %v548
    %v616 = vpop.f32.mrf.mxu0
    %v617 = vadd.f32 0.0, %v616
    %v618 = vpop.f32.mrf.mxu0
    %619 = vdwg.mxu0
    %v620 = vadd.f32 %v544, %v617
    %v621 = vxor.u32 %v620, 2147483648
    %v622 = vmul.f32 %v621, 1.442695
    %v623 = vpow.pop %v622
    %v624 = vadd.f32 %v623, 1.0
    %v625 = vrcp.pop %v624
    %v626 = vmul.f32 1.0, %v625
    %v627 = vtanh.pop %v620
    %v628 = vmul.f32 %v626, %v536
    %630 = vrot.lane.b32.xlu0 %v627, 32
    %v631 = vpop.permute.xlu0 %630
    %v633 = vmul.f32 %v626, %v631
    %635 = vrot.lane.b32.xlu0 %v633, 32
    %v636 = vpop.permute.xlu0 %635
    %v638 = vadd.f32 %v628, %v636
    %v639 = vtanh.pop %v638
    %641 = vrot.lane.b32.xlu0 %v639, 32
    %v642 = vpop.permute.xlu0 %641
    %v644 = vmul.f32 %v626, %v642
    %s645 = scalar_lea.vmem %s0, 12
    %v646 = vld [vmem:[%s645] sm:$0x3]
    %648 = vrot.lane.b32.xlu0 %v644, 64
    %v649 = vpop.permute.xlu0 %648
    %v650 = vsel %vm32, %v649, 0
    %652 = vmatprep.subr.mxu0 0.0
    %653 = vmatpush1.msra.mxu0 0.0
    %654 = vmatprep.subr.mxu0 0.0
    %655 = vmatpush1.msra.mxu0 0.0
    %656 = vmatprep.subr.mxu0 0.0
    %657 = vmatpush1.msra.mxu0 0.0
    %658 = vmatprep.subr.mxu0 0.0
    %659 = vmatpush1.msra.mxu0 0.0
    %660 = vmatprep.subr.mxu0 0.0
    %661 = vmatpush1.msra.mxu0 0.0
    %662 = vmatprep.subr.mxu0 0.0
    %663 = vmatpush1.msra.mxu0 0.0
    %664 = vmatprep.subr.mxu0 0.0
    %665 = vmatpush1.msra.mxu0 0.0
    %666 = vmatprep.subr.mxu0 0.0
    %667 = vmatpush1.msra.mxu0 0.0
    %668 = vmatprep.subr.mxu0 0.0
    %669 = vmatpush1.msra.mxu0 0.0
    %670 = vmatprep.subr.mxu0 0.0
    %671 = vmatpush1.msra.mxu0 0.0
    %672 = vmatprep.subr.mxu0 0.0
    %673 = vmatpush1.msra.mxu0 0.0
    %674 = vmatprep.subr.mxu0 0.0
    %675 = vmatpush1.msra.mxu0 0.0
    %676 = vmatprep.subr.mxu0 0.0
    %677 = vmatpush1.msra.mxu0 %v28
    %678 = vmatprep.subr.mxu0 0.0
    %679 = vmatpush1.msra.mxu0 %v27
    %680 = vmatprep.subr.mxu0 0.0
    %681 = vmatpush1.msra.mxu0 %v26
    %682 = vmatprep.subr.mxu0 0.0
    %683 = vmatpush1.msra.mxu0 %v25
    %684 = vmatprep.subr.mxu0 0.0
    %685 = vmatpush2.msra.mxu0 0.0
    %686 = vmatprep.subr.mxu0 0.0
    %687 = vmatpush2.msra.mxu0 0.0
    %688 = vmatprep.subr.mxu0 0.0
    %689 = vmatpush2.msra.mxu0 0.0
    %690 = vmatprep.subr.mxu0 0.0
    %691 = vmatpush2.msra.mxu0 0.0
    %692 = vmatprep.subr.mxu0 0.0
    %693 = vmatpush2.msra.mxu0 0.0
    %694 = vmatprep.subr.mxu0 0.0
    %695 = vmatpush2.msra.mxu0 0.0
    %696 = vmatprep.subr.mxu0 0.0
    %697 = vmatpush2.msra.mxu0 0.0
    %698 = vmatprep.subr.mxu0 0.0
    %699 = vmatpush2.msra.mxu0 0.0
    %700 = vmatprep.subr.mxu0 0.0
    %701 = vmatpush2.msra.mxu0 0.0
    %702 = vmatprep.subr.mxu0 0.0
    %703 = vmatpush2.msra.mxu0 0.0
    %704 = vmatprep.subr.mxu0 0.0
    %705 = vmatpush2.msra.mxu0 0.0
    %706 = vmatprep.subr.mxu0 0.0
    %707 = vmatpush2.msra.mxu0 0.0
    %708 = vmatprep.subr.mxu0 0.0
    %709 = vmatpush2.msra.mxu0 0.0
    %710 = vmatprep.subr.mxu0 0.0
    %711 = vmatpush2.msra.mxu0 0.0
    %712 = vmatprep.subr.mxu0 0.0
    %713 = vmatpush2.msra.mxu0 0.0
    %714 = vmatprep.subr.mxu0 0.0
    %715 = vmatpush2.msra.mxu0 0.0
    %716 = vmatprep.mubr.f32.mxu0 0.0
    %717 = vmatmul.mubr.f32.gmra.mxu0 %v650
    %v718 = vpop.f32.mrf.mxu0
    %v719 = vadd.f32 0.0, %v718
    %v720 = vpop.f32.mrf.mxu0
    %721 = vdwg.mxu0
    %v722 = vadd.f32 %v646, %v719
    %v723 = vxor.u32 %v722, 2147483648
    %v724 = vmul.f32 %v723, 1.442695
    %v725 = vpow.pop %v724
    %v726 = vadd.f32 %v725, 1.0
    %v727 = vrcp.pop %v726
    %v728 = vmul.f32 1.0, %v727
    %v729 = vtanh.pop %v722
    %v730 = vmul.f32 %v728, %v638
    %732 = vrot.lane.b32.xlu0 %v729, 32
    %v733 = vpop.permute.xlu0 %732
    %v735 = vmul.f32 %v728, %v733
    %737 = vrot.lane.b32.xlu0 %v735, 32
    %v738 = vpop.permute.xlu0 %737
    %v740 = vadd.f32 %v730, %v738
    %v741 = vtanh.pop %v740
    %743 = vrot.lane.b32.xlu0 %v741, 32
    %v744 = vpop.permute.xlu0 %743
    %v746 = vmul.f32 %v728, %v744
    %s747 = scalar_lea.vmem %s0, 14
    %v748 = vld [vmem:[%s747] sm:$0x3]
    %750 = vrot.lane.b32.xlu0 %v746, 64
    %v751 = vpop.permute.xlu0 %750
    %v752 = vsel %vm32, %v751, 0
    %754 = vmatprep.subr.mxu0 0.0
    %755 = vmatpush1.msra.mxu0 0.0
    %756 = vmatprep.subr.mxu0 0.0
    %757 = vmatpush1.msra.mxu0 0.0
    %758 = vmatprep.subr.mxu0 0.0
    %759 = vmatpush1.msra.mxu0 0.0
    %760 = vmatprep.subr.mxu0 0.0
    %761 = vmatpush1.msra.mxu0 0.0
    %762 = vmatprep.subr.mxu0 0.0
    %763 = vmatpush1.msra.mxu0 0.0
    %764 = vmatprep.subr.mxu0 0.0
    %765 = vmatpush1.msra.mxu0 0.0
    %766 = vmatprep.subr.mxu0 0.0
    %767 = vmatpush1.msra.mxu0 0.0
    %768 = vmatprep.subr.mxu0 0.0
    %769 = vmatpush1.msra.mxu0 0.0
    %770 = vmatprep.subr.mxu0 0.0
    %771 = vmatpush1.msra.mxu0 0.0
    %772 = vmatprep.subr.mxu0 0.0
    %773 = vmatpush1.msra.mxu0 0.0
    %774 = vmatprep.subr.mxu0 0.0
    %775 = vmatpush1.msra.mxu0 0.0
    %776 = vmatprep.subr.mxu0 0.0
    %777 = vmatpush1.msra.mxu0 0.0
    %778 = vmatprep.subr.mxu0 0.0
    %779 = vmatpush1.msra.mxu0 %v28
    %780 = vmatprep.subr.mxu0 0.0
    %781 = vmatpush1.msra.mxu0 %v27
    %782 = vmatprep.subr.mxu0 0.0
    %783 = vmatpush1.msra.mxu0 %v26
    %784 = vmatprep.subr.mxu0 0.0
    %785 = vmatpush1.msra.mxu0 %v25
    %786 = vmatprep.subr.mxu0 0.0
    %787 = vmatpush2.msra.mxu0 0.0
    %788 = vmatprep.subr.mxu0 0.0
    %789 = vmatpush2.msra.mxu0 0.0
    %790 = vmatprep.subr.mxu0 0.0
    %791 = vmatpush2.msra.mxu0 0.0
    %792 = vmatprep.subr.mxu0 0.0
    %793 = vmatpush2.msra.mxu0 0.0
    %794 = vmatprep.subr.mxu0 0.0
    %795 = vmatpush2.msra.mxu0 0.0
    %796 = vmatprep.subr.mxu0 0.0
    %797 = vmatpush2.msra.mxu0 0.0
    %798 = vmatprep.subr.mxu0 0.0
    %799 = vmatpush2.msra.mxu0 0.0
    %800 = vmatprep.subr.mxu0 0.0
    %801 = vmatpush2.msra.mxu0 0.0
    %802 = vmatprep.subr.mxu0 0.0
    %803 = vmatpush2.msra.mxu0 0.0
    %804 = vmatprep.subr.mxu0 0.0
    %805 = vmatpush2.msra.mxu0 0.0
    %806 = vmatprep.subr.mxu0 0.0
    %807 = vmatpush2.msra.mxu0 0.0
    %808 = vmatprep.subr.mxu0 0.0
    %809 = vmatpush2.msra.mxu0 0.0
    %810 = vmatprep.subr.mxu0 0.0
    %811 = vmatpush2.msra.mxu0 0.0
    %812 = vmatprep.subr.mxu0 0.0
    %813 = vmatpush2.msra.mxu0 0.0
    %814 = vmatprep.subr.mxu0 0.0
    %815 = vmatpush2.msra.mxu0 0.0
    %816 = vmatprep.subr.mxu0 0.0
    %817 = vmatpush2.msra.mxu0 0.0
    %818 = vmatprep.mubr.f32.mxu0 0.0
    %819 = vmatmul.mubr.f32.gmra.mxu0 %v752
    %v820 = vpop.f32.mrf.mxu0
    %v821 = vadd.f32 0.0, %v820
    %v822 = vpop.f32.mrf.mxu0
    %823 = vdwg.mxu0
    %v824 = vadd.f32 %v748, %v821
    %v825 = vxor.u32 %v824, 2147483648
    %v826 = vmul.f32 %v825, 1.442695
    %v827 = vpow.pop %v826
    %v828 = vadd.f32 %v827, 1.0
    %v829 = vrcp.pop %v828
    %v830 = vmul.f32 1.0, %v829
    %v831 = vtanh.pop %v824
    %v832 = vmul.f32 %v830, %v740
    %834 = vrot.lane.b32.xlu0 %v831, 32
    %v835 = vpop.permute.xlu0 %834
    %v837 = vmul.f32 %v830, %v835
    %839 = vrot.lane.b32.xlu0 %v837, 32
    %v840 = vpop.permute.xlu0 %839
    %v842 = vadd.f32 %v832, %v840
    %v843 = vtanh.pop %v842
    %845 = vrot.lane.b32.xlu0 %v843, 32
    %v846 = vpop.permute.xlu0 %845
    %v848 = vmul.f32 %v830, %v846
    %850 = vrot.lane.b32.xlu0 %v848, 64
    %v851 = vpop.permute.xlu0 %850
    %vm853 = vcmask 254976
    %854 = vst.msk [vmem:[#allocation2] sm:$0x3] %vm853, %v851
    %856 = vrot.lane.b32.xlu0 %v842, 96
    %v857 = vpop.permute.xlu0 %856
    %859 = vst.msk [vmem:[#allocation3] sm:$0x3] %vm853, %v857
    // Predicated region
    $region22: #{text_classifier_forward.3} parent=1 // pred_check
      %p860 = pneg %p18
    $region23: #{text_classifier_forward.3} parent=1 // pred_check_branch
      %862 = sbr.rel (%p860) target = $region25
    $region24: #{text_classifier_forward.3} parent=1 // pred_region
      %v863 = vld [vmem:[%s2] sm:$0xff]
      %v864 = vld [vmem:[%s2 + $0x8] sm:$0xff]
      %v865 = vld [vmem:[%s2 + $0x10] sm:$0xff]
      %v866 = vld [vmem:[%s2 + $0x18] sm:$0xff]
      %v867 = vld [vmem:[%s3] sm:$0x1]
      %v869 = vlaneseq
      %v870 = vshrl.u32 %v869, 7
      %v871 = vsub.s32 0, %v870
      %v872 = vrot.slane %v867, %v871
      %v874 = vsel %vm32, %v851, 0
      %876 = vmatprep.subr.mxu0 0.0
      %877 = vmatpush1.msra.mxu0 0.0
      %878 = vmatprep.subr.mxu0 0.0
      %879 = vmatpush1.msra.mxu0 0.0
      %880 = vmatprep.subr.mxu0 0.0
      %881 = vmatpush1.msra.mxu0 0.0
      %882 = vmatprep.subr.mxu0 0.0
      %883 = vmatpush1.msra.mxu0 0.0
      %884 = vmatprep.subr.mxu0 0.0
      %885 = vmatpush1.msra.mxu0 0.0
      %886 = vmatprep.subr.mxu0 0.0
      %887 = vmatpush1.msra.mxu0 0.0
      %888 = vmatprep.subr.mxu0 0.0
      %889 = vmatpush1.msra.mxu0 0.0
      %890 = vmatprep.subr.mxu0 0.0
      %891 = vmatpush1.msra.mxu0 0.0
      %892 = vmatprep.subr.mxu0 0.0
      %893 = vmatpush1.msra.mxu0 0.0
      %894 = vmatprep.subr.mxu0 0.0
      %895 = vmatpush1.msra.mxu0 0.0
      %896 = vmatprep.subr.mxu0 0.0
      %897 = vmatpush1.msra.mxu0 0.0
      %898 = vmatprep.subr.mxu0 0.0
      %899 = vmatpush1.msra.mxu0 0.0
      %900 = vmatprep.subr.mxu0 0.0
      %901 = vmatpush1.msra.mxu0 %v866
      %902 = vmatprep.subr.mxu0 0.0
      %903 = vmatpush1.msra.mxu0 %v865
      %904 = vmatprep.subr.mxu0 0.0
      %905 = vmatpush1.msra.mxu0 %v864
      %906 = vmatprep.subr.mxu0 0.0
      %907 = vmatpush1.msra.mxu0 %v863
      %908 = vmatprep.subr.mxu0 0.0
      %909 = vmatpush2.msra.mxu0 0.0
      %910 = vmatprep.subr.mxu0 0.0
      %911 = vmatpush2.msra.mxu0 0.0
      %912 = vmatprep.subr.mxu0 0.0
      %913 = vmatpush2.msra.mxu0 0.0
      %914 = vmatprep.subr.mxu0 0.0
      %915 = vmatpush2.msra.mxu0 0.0
      %916 = vmatprep.subr.mxu0 0.0
      %917 = vmatpush2.msra.mxu0 0.0
      %918 = vmatprep.subr.mxu0 0.0
      %919 = vmatpush2.msra.mxu0 0.0
      %920 = vmatprep.subr.mxu0 0.0
      %921 = vmatpush2.msra.mxu0 0.0
      %922 = vmatprep.subr.mxu0 0.0
      %923 = vmatpush2.msra.mxu0 0.0
      %924 = vmatprep.subr.mxu0 0.0
      %925 = vmatpush2.msra.mxu0 0.0
      %926 = vmatprep.subr.mxu0 0.0
      %927 = vmatpush2.msra.mxu0 0.0
      %928 = vmatprep.subr.mxu0 0.0
      %929 = vmatpush2.msra.mxu0 0.0
      %930 = vmatprep.subr.mxu0 0.0
      %931 = vmatpush2.msra.mxu0 0.0
      %932 = vmatprep.subr.mxu0 0.0
      %933 = vmatpush2.msra.mxu0 0.0
      %934 = vmatprep.subr.mxu0 0.0
      %935 = vmatpush2.msra.mxu0 0.0
      %936 = vmatprep.subr.mxu0 0.0
      %937 = vmatpush2.msra.mxu0 0.0
      %938 = vmatprep.subr.mxu0 0.0
      %939 = vmatpush2.msra.mxu0 0.0
      %940 = vmatprep.mubr.f32.mxu0 0.0
      %941 = vmatmul.mubr.f32.gmra.mxu0 %v874
      %v942 = vpop.f32.mrf.mxu0
      %v943 = vadd.f32 %v872, %v942
      %v944 = vpop.f32.mrf.mxu0
      %945 = vdwg.mxu0
      %vm946 = vcmask 25600
      %947 = vst.msk [vmem:[#allocation4] sm:$0x3] %vm946, %v943
    $region25: #{text_classifier_forward.3} parent=1 // pred_fallthru
      _
    // Predicated region
    $region26: #{text_classifier_forward.3} parent=1 // pred_check
      _
    $region27: #{text_classifier_forward.3} parent=1 // pred_check_branch
      %949 = sbr.rel (0) target = $region29
    $region28: #{text_classifier_forward.3} parent=1 // pred_region
      %s951 = ssub.s32 32, 32
      %952 = vsyncadd [#allocation5], %s951
      %s954 = sshll.u32 [#allocation4], 4
      %s955 = int_to_ptr.vmem [resolvable:$true] %s954
      %957 = dma.vmem_to_hbm [thread:$0]  %s955, 32, %s4, [#allocation5]
    $region29: #{text_classifier_forward.3} parent=1 // pred_fallthru
      _
    // Predicated region
    $region30: #{text_classifier_forward.3} parent=1 // pred_check
      _
    $region31: #{text_classifier_forward.3} parent=1 // pred_check_branch
      %959 = sbr.rel (0) target = $region33
    $region32: #{text_classifier_forward.3} parent=1 // pred_region
      %960 = dma.done [#allocation5], 32
    $region33: #{text_classifier_forward.3} parent=1 // pred_fallthru
      _
    %961 = vsyncpa [#allocation5], 1

</llo_original>
